<compile_context>
chip_gen: v5e
topology: v5e:2x2
jax: 0.10.0
libtpu: 0.0.40
codegen_flags: <defaults>
</compile_context>

<pallas_src>
import jax
import jax.numpy as jnp
from jax.experimental import pallas as pl
from jax.experimental.pallas import tpu as pltpu


def _gelu_exact(x):
    # Matches PyTorch F.gelu(approximate='none'): 0.5*x*(1+erf(x/sqrt(2))).
    return 0.5 * x * (1.0 + jax.lax.erf(x * 0.7071067811865476))


def _ffn_kernel(x_ref, w1_ref, wdw_ref, w3_ref, o_ref):
    # x_ref:  [1, Hp+2, W, C]  H-padded input, VMEM-resident per batch element
    # w1_ref: [C, Cm]          first 1x1 conv as a matrix         (resident)
    # wdw_ref:[3, 3, Cm]       depthwise 3x3 weights, channel-last (resident)
    # w3_ref: [Cm, C]          second 1x1 conv as a matrix        (resident)
    # o_ref:  [1, TH, W, C]    TH output rows for this grid step
    _, TH, W, C = o_ref.shape
    Cm = w1_ref.shape[1]
    j = pl.program_id(1)

    # (TH+2)-row window (1-row halo each side) of the padded image.  Always in
    # bounds: j*TH + TH + 2 <= Hp + 2.
    row0 = pl.multiple_of(j * TH, TH)
    xt = x_ref[0, pl.ds(row0, TH + 2), :, :]                   # [TH+2, W, C]
    xt2 = xt.reshape((TH + 2) * W, C)                          # rows = (h, w) flat

    # ---- pointwise conv 1 (1x1) + exact GELU (MXU, f32 accumulation) -------
    lhs = xt2 if xt2.dtype == w1_ref.dtype else xt2.astype(w1_ref.dtype)
    h1 = jnp.dot(lhs, w1_ref[...], preferred_element_type=jnp.float32)
    h1 = _gelu_exact(h1)                                       # [(TH+2)*W, Cm] f32
    # Halo rows come from the zero-padded x rows -> GELU(0 @ w1) = 0, i.e.
    # exactly the depthwise conv's zero padding in H.

    # ---- depthwise 3x3, padding=1 -------------------------------------------
    # Fold the 3 row taps first: three ky-summed tiles (TH*W rows) for the
    # left / center / right column taps, then one roll + one column-masked
    # select per side tap.  No full-size shifted halo-tile copies are live.
    R = TH * W
    wdw = wdw_ref[...].astype(jnp.float32)                     # [3, 3, Cm]

    def wrow(ky, kx):
        return wdw[ky, kx].reshape(1, Cm)

    h10 = h1[0:R]                                              # rows y-1 (per tile)
    h11 = h1[W:W + R]                                          # rows y
    h12 = h1[2 * W:2 * W + R]                                  # rows y+1
    left = wrow(0, 0) * h10 + wrow(1, 0) * h11 + wrow(2, 0) * h12
    cent = wrow(0, 1) * h10 + wrow(1, 1) * h11 + wrow(2, 1) * h12
    rght = wrow(0, 2) * h10 + wrow(1, 2) * h11 + wrow(2, 2) * h12

    col = jax.lax.broadcasted_iota(jnp.int32, (R, 1), 0) % W   # (rows, 1) mask src
    # x-1 tap: row-major roll down by one; positions with col==0 would receive
    # data leaked from the previous image row -> zero them (W zero padding).
    acc = cent + jnp.where(col > 0, pltpu.roll(left, shift=1, axis=0), 0.0)
    # x+1 tap: roll up by one == circular shift by R-1 (pltpu.roll requires a
    # non-negative shift); the wrap lands on col==W-1 which the mask clears.
    acc = acc + jnp.where(col < W - 1, pltpu.roll(rght, shift=R - 1, axis=0), 0.0)
    h2 = _gelu_exact(acc)                                      # [TH*W, Cm] f32

    # ---- pointwise conv 2 (1x1) ---------------------------------------------
    rhs_in = h2 if h2.dtype == w3_ref.dtype else h2.astype(w3_ref.dtype)
    out = jnp.dot(rhs_in, w3_ref[...], preferred_element_type=jnp.float32)
    # TODO(synk): when dim < 128 the store lane width is C (lane-sparse); a
    # lane-dense output slab (wrapper-side (B, H, W*C) view) would speed the
    # store path at the cost of an in-kernel relayout.
    o_ref[0] = out.reshape(TH, W, C).astype(o_ref.dtype)


def _vmem_budget_bytes():
    """Usable VMEM budget, generation-aware (v5e/v6e: 128 MiB, v7x: 64 MiB)."""
    try:
        cap = pltpu.get_tpu_info().vmem_capacity_bytes
    except Exception:          # not on a real TPU (e.g. interpret) -> v7x-safe
        cap = 64 * 1024 * 1024
    return int(cap) * 3 // 4   # headroom for mosaic internals / spills


def _pick_tile_h(H, W, C, Cm, x_itemsize, w_itemsize, budget_bytes):
    """Largest (sublane/MXU-friendly) TH whose footprint fits the budget.
    Footprint covers the double-buffered resident input frame, weights, the
    output block, and the live f32 intermediates (h1 + 3 ky-sums + rolled
    temp + h2/out)."""
    w_bytes = 2 * (C * Cm + Cm * C + 9 * Cm) * w_itemsize      # 2x (pipeline bufs)
    best, best_key = 1, (False, False, 0)
    for th in range(1, H + 1):
        hp = -(-H // th) * th                                  # H padded up to mult of th
        frame = 2 * (hp + 2) * W * C * x_itemsize              # resident input, 2 bufs
        out_b = 2 * th * W * C * x_itemsize                    # output block, 2 bufs
        inter = (6 * th + 2) * W * Cm * 4                      # live f32 intermediates
        if w_bytes + frame + out_b + inter > budget_bytes:
            continue
        key = ((th * W) % 8 == 0, th * W >= 512, th)           # sublane/MXU friendly,
        if key > best_key:                                     # then biggest tile
            best, best_key = th, key
    return best


def feedforward_pallas(x, w1, wdw, w3, *, tile_h=None, matmul_dtype=None):
    """MST FeedForward forward pass.

    x:   [B, H, W, C]  (NHWC; the module's two permutes cancel out)
    w1:  [C, Cm]       first 1x1 conv as a matrix
    wdw: [3, 3, Cm]    depthwise 3x3 weights, channel-last
    w3:  [Cm, C]       second 1x1 conv as a matrix
    matmul_dtype: optional dtype (e.g. jnp.bfloat16) for the two 1x1-conv
      matmul operands (full MXU rate); accumulation stays f32.  None = native.
    """
    B, H, W, C = x.shape
    Cm = w1.shape[1]
    if matmul_dtype is not None:
        w1 = w1.astype(matmul_dtype)
        w3 = w3.astype(matmul_dtype)

    budget = _vmem_budget_bytes()
    if tile_h is None:
        tile_h = _pick_tile_h(H, W, C, Cm, x.dtype.itemsize, w1.dtype.itemsize,
                              budget)
    TH = max(1, min(int(tile_h), H))
    nh = -(-H // TH)
    Hp = nh * TH

    # One zero halo row above row 0 plus (Hp - H + 1) zero rows below row H-1:
    # GELU(0 @ w1) == 0, so these realize the depthwise conv's H zero padding
    # (and round H up to a multiple of TH) with no in-kernel boundary branches.
    # TODO(synk): the pad costs one extra HBM read+write of the frame; for
    # memory-bound shapes, zero the halo rows in-kernel with pl.when instead.
    x_pad = jnp.pad(x, ((0, 0), (1, Hp - H + 1), (0, 0), (0, 0)))

    # TODO(synk): on v7x (64 MiB VMEM/TC), frames where the resident padded
    # input no longer fits should switch to a manual halo DMA per H-tile
    # (memory_space=pl.ANY + make_async_copy double buffer) and single-buffered
    # weight specs.
    out = pl.pallas_call(
        _ffn_kernel,
        out_shape=jax.ShapeDtypeStruct((B, Hp, W, C), x.dtype),
        grid_spec=pltpu.PrefetchScalarGridSpec(
            num_scalar_prefetch=0,
            grid=(B, nh),
            in_specs=[
                # Padded image: resident per batch element (index ignores j),
                # DMA'd once per b and reused across all H-tiles.
                pl.BlockSpec((1, Hp + 2, W, C), lambda b, j: (b, 0, 0, 0)),
                # Weights: constant index maps -> loaded once, stay resident.
                pl.BlockSpec((C, Cm), lambda b, j: (0, 0)),
                pl.BlockSpec((3, 3, Cm), lambda b, j: (0, 0, 0)),
                pl.BlockSpec((Cm, C), lambda b, j: (0, 0)),
            ],
            out_specs=pl.BlockSpec((1, TH, W, C), lambda b, j: (b, j, 0, 0)),
        ),
        compiler_params=pltpu.CompilerParams(
            dimension_semantics=("parallel", "parallel"),
            vmem_limit_bytes=budget,
        ),
    )(x_pad, w1, wdw, w3)
    return out if Hp == H else out[:, :H]


def feedforward_ref(x, w1, wdw, w3):
    """Pure-JAX NHWC reference mirroring the PyTorch module."""
    B, H, W, C = x.shape
    Cm = w1.shape[1]
    h1 = _gelu_exact(jnp.einsum("bhwc,cm->bhwm", x, w1))
    hp = jnp.pad(h1, ((0, 0), (1, 1), (1, 1), (0, 0)))
    acc = jnp.zeros((B, H, W, Cm), h1.dtype)
    for ky in range(3):
        for kx in range(3):
            acc = acc + wdw[ky, kx] * hp[:, ky:ky + H, kx:kx + W, :]
    h2 = _gelu_exact(acc)
    return jnp.einsum("bhwm,mc->bhwc", h2, w3)


if __name__ == "__main__":
    dim, mult = 4, 4
    Cm = dim * mult
    B, H, W = 2, 16, 16

    key = jax.random.PRNGKey(0)
    kx_, k1, k2, k3 = jax.random.split(key, 4)

    x = jax.random.normal(kx_, (B, H, W, dim), dtype=jnp.float32)

    # Parameter shapes follow the PyTorch module:
    #   conv1 weight [Cm, C, 1, 1]      -> matrix [C, Cm]
    #   depthwise weight [Cm, 1, 3, 3]  -> [3, 3, Cm]
    #   conv3 weight [C, Cm, 1, 1]      -> matrix [Cm, C]
    w1_pt = jax.random.normal(k1, (Cm, dim, 1, 1), dtype=jnp.float32) * 0.1
    wdw_pt = jax.random.normal(k2, (Cm, 1, 3, 3), dtype=jnp.float32) * 0.1
    w3_pt = jax.random.normal(k3, (dim, Cm, 1, 1), dtype=jnp.float32) * 0.1

    w1 = jnp.transpose(w1_pt[:, :, 0, 0], (1, 0))          # [C, Cm]
    wdw = jnp.transpose(wdw_pt[:, 0, :, :], (1, 2, 0))     # [3, 3, Cm]
    w3 = jnp.transpose(w3_pt[:, :, 0, 0], (1, 0))          # [Cm, C]

    ref = feedforward_ref(x, w1, wdw, w3)

    # 1) f32, tile_h=8: exercises the H-tile halo crossing at row 8 plus the
    #    roll+mask W boundaries; exact-GELU f32 path must match tightly.
    out = jax.block_until_ready(feedforward_pallas(x, w1, wdw, w3, tile_h=8))
    assert out.shape == (B, H, W, dim)
    err = float(jnp.max(jnp.abs(out - ref)))
    assert err < 1e-4, f"f32 mismatch vs reference: {err}"

    # 2) H not a multiple of tile_h: exercises the pad-H + slice-back fallback.
    x9 = x[:, :9]
    ref9 = feedforward_ref(x9, w1, wdw, w3)
    out9 = jax.block_until_ready(feedforward_pallas(x9, w1, wdw, w3, tile_h=4))
    err9 = float(jnp.max(jnp.abs(out9 - ref9)))
    assert err9 < 1e-4, f"padded-H mismatch vs reference: {err9}"

    # 3) bf16 matmul operands (full-MXU-rate path), f32 accumulation; also
    #    exercises the auto tile-height selection.
    outb = jax.block_until_ready(
        feedforward_pallas(x, w1, wdw, w3, matmul_dtype=jnp.bfloat16))
    errb = float(jnp.max(jnp.abs(outb - ref)))
    assert errb < 2e-2, f"bf16 mismatch vs reference: {errb}"

    print("KERNEL_OK")
</pallas_src>

<mosaic_0001>
module attributes {stable_mosaic.version = 11 : i64} {
  func.func @_ffn_kernel(%arg0: i32, %arg1: i32, %arg2: memref<1x18x16x4xf32, #tpu.memory_space<vmem>>, %arg3: memref<4x16xf32, #tpu.memory_space<vmem>>, %arg4: memref<3x3x16xf32, #tpu.memory_space<vmem>>, %arg5: memref<16x4xf32, #tpu.memory_space<vmem>>, %arg6: memref<1x8x16x4xf32, #tpu.memory_space<vmem>>) attributes {dimension_semantics = [#tpu.dimension_semantics<parallel>, #tpu.dimension_semantics<parallel>], iteration_bounds = array<i64: 2, 2>, scalar_prefetch = 0 : i64, scratch_operands = 0 : i64, tpu.core_type = #tpu.core_type<tc>, window_params = [{transform_indices = @transform_0, window_bounds = array<i64: 1, 18, 16, 4>}, {pipeline_mode = #tpu.pipeline_mode<synchronous>, transform_indices = @transform_1, window_bounds = array<i64: 4, 16>}, {pipeline_mode = #tpu.pipeline_mode<synchronous>, transform_indices = @transform_2, window_bounds = array<i64: 3, 3, 16>}, {pipeline_mode = #tpu.pipeline_mode<synchronous>, transform_indices = @transform_3, window_bounds = array<i64: 16, 4>}, {transform_indices = @transform_4, window_bounds = array<i64: 1, 8, 16, 4>}]} {
    %c8_i32 = arith.constant 8 : i32
    %0 = arith.muli %arg1, %c8_i32 : i32
    %1 = tpu.assume_multiple %0, 8 : i32
    %c0 = arith.constant 0 : index
    %2 = arith.index_cast %1 : i32 to index
    %c0_0 = arith.constant 0 : index
    %c0_1 = arith.constant 0 : index
    %3 = vector.load %arg2[%c0, %2, %c0_0, %c0_1] : memref<1x18x16x4xf32, #tpu.memory_space<vmem>>, vector<1x10x16x4xf32>
    %4 = vector.shape_cast %3 : vector<1x10x16x4xf32> to vector<10x16x4xf32>
    %5 = vector.shape_cast %4 : vector<10x16x4xf32> to vector<160x4xf32>
    %c0_2 = arith.constant 0 : index
    %c0_3 = arith.constant 0 : index
    %6 = vector.load %arg3[%c0_2, %c0_3] : memref<4x16xf32, #tpu.memory_space<vmem>>, vector<4x16xf32>
    %cst = arith.constant dense<0.000000e+00> : vector<160x16xf32>
    %7 = tpu.matmul %5, %6, %cst {dimension_numbers = #tpu.dot_dimension_numbers<[1], [0], [0], [1], [0, 0, 1, 1], [], []>} : vector<160x4xf32>, vector<4x16xf32>, vector<160x16xf32> -> vector<160x16xf32>
    %cst_4 = arith.constant 5.000000e-01 : f32
    %8 = vector.broadcast %cst_4 : f32 to vector<160x16xf32>
    %9 = arith.mulf %8, %7 : vector<160x16xf32>
    %cst_5 = arith.constant 0.707106769 : f32
    %10 = vector.broadcast %cst_5 : f32 to vector<160x16xf32>
    %11 = arith.mulf %7, %10 : vector<160x16xf32>
    %12 = math.erf %11 : vector<160x16xf32>
    %cst_6 = arith.constant 1.000000e+00 : f32
    %13 = vector.broadcast %cst_6 : f32 to vector<160x16xf32>
    %14 = arith.addf %13, %12 : vector<160x16xf32>
    %15 = arith.mulf %9, %14 : vector<160x16xf32>
    %c0_7 = arith.constant 0 : index
    %c0_8 = arith.constant 0 : index
    %c0_9 = arith.constant 0 : index
    %16 = vector.load %arg4[%c0_7, %c0_8, %c0_9] : memref<3x3x16xf32, #tpu.memory_space<vmem>>, vector<3x3x16xf32>
    %17 = vector.extract_strided_slice %15 {offsets = [0, 0], sizes = [128, 16], strides = [1, 1]} : vector<160x16xf32> to vector<128x16xf32>
    %18 = vector.extract_strided_slice %15 {offsets = [16, 0], sizes = [128, 16], strides = [1, 1]} : vector<160x16xf32> to vector<128x16xf32>
    %19 = vector.extract_strided_slice %15 {offsets = [32, 0], sizes = [128, 16], strides = [1, 1]} : vector<160x16xf32> to vector<128x16xf32>
    %20 = vector.extract_strided_slice %16 {offsets = [0, 0, 0], sizes = [1, 1, 16], strides = [1, 1, 1]} : vector<3x3x16xf32> to vector<1x1x16xf32>
    %21 = vector.shape_cast %20 : vector<1x1x16xf32> to vector<16xf32>
    %22 = vector.shape_cast %21 : vector<16xf32> to vector<1x16xf32>
    %23 = vector.broadcast %22 : vector<1x16xf32> to vector<128x16xf32>
    %24 = arith.mulf %23, %17 : vector<128x16xf32>
    %25 = vector.extract_strided_slice %16 {offsets = [1, 0, 0], sizes = [1, 1, 16], strides = [1, 1, 1]} : vector<3x3x16xf32> to vector<1x1x16xf32>
    %26 = vector.shape_cast %25 : vector<1x1x16xf32> to vector<16xf32>
    %27 = vector.shape_cast %26 : vector<16xf32> to vector<1x16xf32>
    %28 = vector.broadcast %27 : vector<1x16xf32> to vector<128x16xf32>
    %29 = arith.mulf %28, %18 : vector<128x16xf32>
    %30 = arith.addf %24, %29 : vector<128x16xf32>
    %31 = vector.extract_strided_slice %16 {offsets = [2, 0, 0], sizes = [1, 1, 16], strides = [1, 1, 1]} : vector<3x3x16xf32> to vector<1x1x16xf32>
    %32 = vector.shape_cast %31 : vector<1x1x16xf32> to vector<16xf32>
    %33 = vector.shape_cast %32 : vector<16xf32> to vector<1x16xf32>
    %34 = vector.broadcast %33 : vector<1x16xf32> to vector<128x16xf32>
    %35 = arith.mulf %34, %19 : vector<128x16xf32>
    %36 = arith.addf %30, %35 : vector<128x16xf32>
    %37 = vector.extract_strided_slice %16 {offsets = [0, 1, 0], sizes = [1, 1, 16], strides = [1, 1, 1]} : vector<3x3x16xf32> to vector<1x1x16xf32>
    %38 = vector.shape_cast %37 : vector<1x1x16xf32> to vector<16xf32>
    %39 = vector.shape_cast %38 : vector<16xf32> to vector<1x16xf32>
    %40 = vector.broadcast %39 : vector<1x16xf32> to vector<128x16xf32>
    %41 = arith.mulf %40, %17 : vector<128x16xf32>
    %42 = vector.extract_strided_slice %16 {offsets = [1, 1, 0], sizes = [1, 1, 16], strides = [1, 1, 1]} : vector<3x3x16xf32> to vector<1x1x16xf32>
    %43 = vector.shape_cast %42 : vector<1x1x16xf32> to vector<16xf32>
    %44 = vector.shape_cast %43 : vector<16xf32> to vector<1x16xf32>
    %45 = vector.broadcast %44 : vector<1x16xf32> to vector<128x16xf32>
    %46 = arith.mulf %45, %18 : vector<128x16xf32>
    %47 = arith.addf %41, %46 : vector<128x16xf32>
    %48 = vector.extract_strided_slice %16 {offsets = [2, 1, 0], sizes = [1, 1, 16], strides = [1, 1, 1]} : vector<3x3x16xf32> to vector<1x1x16xf32>
    %49 = vector.shape_cast %48 : vector<1x1x16xf32> to vector<16xf32>
    %50 = vector.shape_cast %49 : vector<16xf32> to vector<1x16xf32>
    %51 = vector.broadcast %50 : vector<1x16xf32> to vector<128x16xf32>
    %52 = arith.mulf %51, %19 : vector<128x16xf32>
    %53 = arith.addf %47, %52 : vector<128x16xf32>
    %54 = vector.extract_strided_slice %16 {offsets = [0, 2, 0], sizes = [1, 1, 16], strides = [1, 1, 1]} : vector<3x3x16xf32> to vector<1x1x16xf32>
    %55 = vector.shape_cast %54 : vector<1x1x16xf32> to vector<16xf32>
    %56 = vector.shape_cast %55 : vector<16xf32> to vector<1x16xf32>
    %57 = vector.broadcast %56 : vector<1x16xf32> to vector<128x16xf32>
    %58 = arith.mulf %57, %17 : vector<128x16xf32>
    %59 = vector.extract_strided_slice %16 {offsets = [1, 2, 0], sizes = [1, 1, 16], strides = [1, 1, 1]} : vector<3x3x16xf32> to vector<1x1x16xf32>
    %60 = vector.shape_cast %59 : vector<1x1x16xf32> to vector<16xf32>
    %61 = vector.shape_cast %60 : vector<16xf32> to vector<1x16xf32>
    %62 = vector.broadcast %61 : vector<1x16xf32> to vector<128x16xf32>
    %63 = arith.mulf %62, %18 : vector<128x16xf32>
    %64 = arith.addf %58, %63 : vector<128x16xf32>
    %65 = vector.extract_strided_slice %16 {offsets = [2, 2, 0], sizes = [1, 1, 16], strides = [1, 1, 1]} : vector<3x3x16xf32> to vector<1x1x16xf32>
    %66 = vector.shape_cast %65 : vector<1x1x16xf32> to vector<16xf32>
    %67 = vector.shape_cast %66 : vector<16xf32> to vector<1x16xf32>
    %68 = vector.broadcast %67 : vector<1x16xf32> to vector<128x16xf32>
    %69 = arith.mulf %68, %19 : vector<128x16xf32>
    %70 = arith.addf %64, %69 : vector<128x16xf32>
    %71 = tpu.iota {dimensions = array<i32: 0>} : vector<128x1xi32>
    %c16_i32 = arith.constant 16 : i32
    %c0_i32 = arith.constant 0 : i32
    %72 = arith.cmpi eq, %c16_i32, %c0_i32 : i32
    %c1_i32 = arith.constant 1 : i32
    %73 = arith.select %72, %c1_i32, %c16_i32 : i32
    %74 = vector.broadcast %73 : i32 to vector<128x1xi32>
    %75 = arith.remsi %71, %74 : vector<128x1xi32>
    %c0_i32_10 = arith.constant 0 : i32
    %76 = vector.broadcast %c0_i32_10 : i32 to vector<128x1xi32>
    %77 = arith.cmpi ne, %75, %76 : vector<128x1xi32>
    %c0_i32_11 = arith.constant 0 : i32
    %78 = vector.broadcast %c0_i32_11 : i32 to vector<128x1xi32>
    %79 = arith.cmpi slt, %75, %78 : vector<128x1xi32>
    %c0_i32_12 = arith.constant 0 : i32
    %80 = arith.cmpi slt, %73, %c0_i32_12 : i32
    %81 = vector.broadcast %80 : i1 to vector<128x1xi1>
    %82 = vector.broadcast %81 : vector<128x1xi1> to vector<128x1xi1>
    %83 = arith.xori %79, %82 : vector<128x1xi1>
    %84 = arith.andi %83, %77 : vector<128x1xi1>
    %85 = vector.broadcast %73 : i32 to vector<128x1xi32>
    %86 = arith.addi %75, %85 : vector<128x1xi32>
    %87 = arith.select %84, %86, %75 : vector<128x1xi1>, vector<128x1xi32>
    %c0_i32_13 = arith.constant 0 : i32
    %88 = vector.broadcast %c0_i32_13 : i32 to vector<128x1xi32>
    %89 = arith.cmpi sgt, %87, %88 : vector<128x1xi32>
    %c1_i32_14 = arith.constant 1 : i32
    %90 = tpu.dynamic_rotate %36 by %c1_i32_14 dim 0 : vector<128x16xf32>, i32 -> vector<128x16xf32>
    %cst_15 = arith.constant 0.000000e+00 : f32
    %91 = vector.shape_cast %89 : vector<128x1xi1> to vector<128x1xi1>
    %92 = vector.broadcast %91 : vector<128x1xi1> to vector<128x16xi1>
    %93 = vector.broadcast %cst_15 : f32 to vector<128x16xf32>
    %94 = arith.select %92, %90, %93 : vector<128x16xi1>, vector<128x16xf32>
    %95 = arith.addf %53, %94 : vector<128x16xf32>
    %c15_i32 = arith.constant 15 : i32
    %96 = vector.broadcast %c15_i32 : i32 to vector<128x1xi32>
    %97 = arith.cmpi slt, %87, %96 : vector<128x1xi32>
    %c127_i32 = arith.constant 127 : i32
    %98 = tpu.dynamic_rotate %70 by %c127_i32 dim 0 : vector<128x16xf32>, i32 -> vector<128x16xf32>
    %cst_16 = arith.constant 0.000000e+00 : f32
    %99 = vector.shape_cast %97 : vector<128x1xi1> to vector<128x1xi1>
    %100 = vector.broadcast %99 : vector<128x1xi1> to vector<128x16xi1>
    %101 = vector.broadcast %cst_16 : f32 to vector<128x16xf32>
    %102 = arith.select %100, %98, %101 : vector<128x16xi1>, vector<128x16xf32>
    %103 = arith.addf %95, %102 : vector<128x16xf32>
    %cst_17 = arith.constant 5.000000e-01 : f32
    %104 = vector.broadcast %cst_17 : f32 to vector<128x16xf32>
    %105 = arith.mulf %104, %103 : vector<128x16xf32>
    %cst_18 = arith.constant 0.707106769 : f32
    %106 = vector.broadcast %cst_18 : f32 to vector<128x16xf32>
    %107 = arith.mulf %103, %106 : vector<128x16xf32>
    %108 = math.erf %107 : vector<128x16xf32>
    %cst_19 = arith.constant 1.000000e+00 : f32
    %109 = vector.broadcast %cst_19 : f32 to vector<128x16xf32>
    %110 = arith.addf %109, %108 : vector<128x16xf32>
    %111 = arith.mulf %105, %110 : vector<128x16xf32>
    %c0_20 = arith.constant 0 : index
    %c0_21 = arith.constant 0 : index
    %112 = vector.load %arg5[%c0_20, %c0_21] : memref<16x4xf32, #tpu.memory_space<vmem>>, vector<16x4xf32>
    %cst_22 = arith.constant dense<0.000000e+00> : vector<128x4xf32>
    %113 = tpu.matmul %111, %112, %cst_22 {dimension_numbers = #tpu.dot_dimension_numbers<[1], [0], [0], [1], [0, 0, 1, 1], [], []>} : vector<128x16xf32>, vector<16x4xf32>, vector<128x4xf32> -> vector<128x4xf32>
    %114 = vector.shape_cast %113 : vector<128x4xf32> to vector<8x16x4xf32>
    %c0_23 = arith.constant 0 : index
    %c0_24 = arith.constant 0 : index
    %c0_25 = arith.constant 0 : index
    %c0_26 = arith.constant 0 : index
    %115 = vector.load %arg6[%c0_23, %c0_24, %c0_25, %c0_26] : memref<1x8x16x4xf32, #tpu.memory_space<vmem>>, vector<1x8x16x4xf32>
    %116 = vector.shape_cast %115 : vector<1x8x16x4xf32> to vector<8x16x4xf32>
    %117 = vector.shape_cast %114 : vector<8x16x4xf32> to vector<1x8x16x4xf32>
    tpu.vector_store %arg6[%c0_23, %c0_24, %c0_25, %c0_26], %117 {strides = array<i32>} : memref<1x8x16x4xf32, #tpu.memory_space<vmem>>, vector<1x8x16x4xf32>,
    return
  }
  func.func @transform_0(%arg0: i32, %arg1: i32) -> (i32, i32, i32, i32) {
    %c0_i32 = arith.constant 0 : i32
    %c0_i32_0 = arith.constant 0 : i32
    %c0_i32_1 = arith.constant 0 : i32
    %c0_i32_2 = arith.constant 0 : i32
    return %arg0, %c0_i32, %c0_i32_0, %c0_i32_1 : i32, i32, i32, i32
  }
  func.func @transform_1(%arg0: i32, %arg1: i32) -> (i32, i32) {
    %c0_i32 = arith.constant 0 : i32
    %c0_i32_0 = arith.constant 0 : i32
    %c0_i32_1 = arith.constant 0 : i32
    return %c0_i32, %c0_i32_0 : i32, i32
  }
  func.func @transform_2(%arg0: i32, %arg1: i32) -> (i32, i32, i32) {
    %c0_i32 = arith.constant 0 : i32
    %c0_i32_0 = arith.constant 0 : i32
    %c0_i32_1 = arith.constant 0 : i32
    %c0_i32_2 = arith.constant 0 : i32
    return %c0_i32, %c0_i32_0, %c0_i32_1 : i32, i32, i32
  }
  func.func @transform_3(%arg0: i32, %arg1: i32) -> (i32, i32) {
    %c0_i32 = arith.constant 0 : i32
    %c0_i32_0 = arith.constant 0 : i32
    %c0_i32_1 = arith.constant 0 : i32
    return %c0_i32, %c0_i32_0 : i32, i32
  }
  func.func @transform_4(%arg0: i32, %arg1: i32) -> (i32, i32, i32, i32) {
    %c0_i32 = arith.constant 0 : i32
    %c0_i32_0 = arith.constant 0 : i32
    %c0_i32_1 = arith.constant 0 : i32
    return %arg0, %arg1, %c0_i32, %c0_i32_0 : i32, i32, i32, i32
  }
}

</mosaic_0001>

<llo_original>
// kernel: tpu_custom_call.1
$region0: #{tpu_custom_call.1}
  #allocation0 [shape = 'u32[]', space=smem, size = 0x4, offset = 0x4, fixed_abs, tag = 'smem constant byte address 0x4 - core index']
  #allocation1 [shape = 'u32[72,128]{1,0:T(1,128)}', space=vmem, size = 0x9000, scoped, tag = 'internal scratch']
  %s0 = inlined_call_operand.vmem [shape: f32[2,18,16,4], index: 0, kind: input, shape index: {}]
  %s1 = inlined_call_operand.vmem [shape: f32[4,16], index: 1, kind: input, shape index: {}]
  %s2 = inlined_call_operand.vmem [shape: f32[3,3,16], index: 2, kind: input, shape index: {}]
  %s3 = inlined_call_operand.vmem [shape: f32[16,4], index: 3, kind: input, shape index: {}]
  %s4 = inlined_call_operand.vmem [shape: f32[2,16,16,4], index: 4, kind: output, shape index: {}]
  %s5 = sld [smem:[#allocation0]]
  $region49: #{tpu_custom_call.1} parent=0
    _
  %s7 = ssub.s32 1, %s5
  %s8 = scalar_select 0, %s7, %s5
  loop: start=0, step=1, limit=6
  $region2: #{tpu_custom_call.1} parent=0 // loop_pre_header
    _
  $region3: #{tpu_custom_call.1} parent=0 // loop_header
    %s10 = sphi 0, %s14
    %p11 = scmp.ge.s32.totalorder %s10, 6
    %s17 = sphi 0, %s29
    %s18 = sphi 0, %s25
    %s19 = sphi 0, %s17
    %s20 = sphi 0, %s18
    %s21 = sphi 0, %s19
    %s22 = sphi 0, %s20
    %s32 = sphi 0, %s34
    %s35 = sphi 0, %s32
    %s36 = sphi 0, %s35
    %s52 = sphi 0, %s36
    %s56 = sphi 0, %s56
    %s58 = sphi 0, %s56
    %s59 = sphi 0, %s58
    %s73 = sphi 0, %s59
    %s77 = sphi 0, %s77
    %s79 = sphi 0, %s77
    %s80 = sphi 0, %s79
    %s94 = sphi 0, %s80
    %s98 = sphi 0, %s98
    %s100 = sphi 0, %s98
    %s101 = sphi 0, %s100
    %s115 = sphi 0, %s101
    %s123 = sphi 0, %s125
    %s126 = sphi 0, %s123
    %s127 = sphi 0, %s126
    %s143 = sphi 0, %s127
  $region4: #{tpu_custom_call.1} parent=0 // loop_header_branch
    %13 = sbr.rel (%p11) target = $region8
  $region5: #{tpu_custom_call.1} parent=0 // loop_body
    %s15 = ssub.s32 %s10, 1
    %s16 = ssub.s32 %s10, 2
    %s23 = sadd.s32 1, %s18
    %p24 = scmp.ge.s32.totalorder %s23, 2
    %s25 = scalar_select %p24, 0, %s23
    %s26 = sadd.s32 1, %s17
    %s27 = scalar_select %p24, %s26, %s17
    %p28 = scmp.ge.s32.totalorder %s27, 2
    %s29 = scalar_select %p28, 0, %s27
    %s30 = ssub.s32 %s17, %s29
    %p31 = scmp.eq.s32.totalorder %s30, 0
    %s33 = sadd.s32 %s32, 1
    %s34 = scalar_select %p31, %s32, %s33
    %p37 = pneg %p31
    %p38 = scmp.eq.s32.totalorder %s10, 3
    %p39 = por %p37, %p38
    %p40 = scmp.ne.s32.totalorder %s32, %s35
    %p41 = scmp.eq.s32.totalorder %s10, 0
    %p42 = por %p40, %p41
    %p43 = scmp.ne.s32.totalorder %s32, %s35
    %p44 = scmp.eq.s32.totalorder %s15, 3
    %p45 = por %p43, %p44
    %p46 = scmp.ne.s32.totalorder %s35, %s36
    %p47 = scmp.eq.s32.totalorder %s15, 0
    %p48 = por %p46, %p47
    %p49 = scmp.ne.s32.totalorder %s35, %s36
    %p50 = scmp.eq.s32.totalorder %s16, 3
    %p51 = por %p49, %p50
    %p53 = scmp.ne.s32.totalorder %s36, %s52
    %p54 = scmp.eq.s32.totalorder %s16, 0
    %p55 = por %p53, %p54
    %s57 = sadd.s32 %s56, 1
    %p60 = scmp.eq.s32.totalorder %s10, 3
    %p61 = scmp.ne.s32.totalorder %s56, %s58
    %p62 = scmp.eq.s32.totalorder %s10, 0
    %p63 = por %p61, %p62
    %p64 = scmp.ne.s32.totalorder %s56, %s58
    %p65 = scmp.eq.s32.totalorder %s15, 3
    %p66 = por %p64, %p65
    %p67 = scmp.ne.s32.totalorder %s58, %s59
    %p68 = scmp.eq.s32.totalorder %s15, 0
    %p69 = por %p67, %p68
    %p70 = scmp.ne.s32.totalorder %s58, %s59
    %p71 = scmp.eq.s32.totalorder %s16, 3
    %p72 = por %p70, %p71
    %p74 = scmp.ne.s32.totalorder %s59, %s73
    %p75 = scmp.eq.s32.totalorder %s16, 0
    %p76 = por %p74, %p75
    %s78 = sadd.s32 %s77, 1
    %p81 = scmp.eq.s32.totalorder %s10, 3
    %p82 = scmp.ne.s32.totalorder %s77, %s79
    %p83 = scmp.eq.s32.totalorder %s10, 0
    %p84 = por %p82, %p83
    %p85 = scmp.ne.s32.totalorder %s77, %s79
    %p86 = scmp.eq.s32.totalorder %s15, 3
    %p87 = por %p85, %p86
    %p88 = scmp.ne.s32.totalorder %s79, %s80
    %p89 = scmp.eq.s32.totalorder %s15, 0
    %p90 = por %p88, %p89
    %p91 = scmp.ne.s32.totalorder %s79, %s80
    %p92 = scmp.eq.s32.totalorder %s16, 3
    %p93 = por %p91, %p92
    %p95 = scmp.ne.s32.totalorder %s80, %s94
    %p96 = scmp.eq.s32.totalorder %s16, 0
    %p97 = por %p95, %p96
    %s99 = sadd.s32 %s98, 1
    %p102 = scmp.eq.s32.totalorder %s10, 3
    %p103 = scmp.ne.s32.totalorder %s98, %s100
    %p104 = scmp.eq.s32.totalorder %s10, 0
    %p105 = por %p103, %p104
    %p106 = scmp.ne.s32.totalorder %s98, %s100
    %p107 = scmp.eq.s32.totalorder %s15, 3
    %p108 = por %p106, %p107
    %p109 = scmp.ne.s32.totalorder %s100, %s101
    %p110 = scmp.eq.s32.totalorder %s15, 0
    %p111 = por %p109, %p110
    %p112 = scmp.ne.s32.totalorder %s100, %s101
    %p113 = scmp.eq.s32.totalorder %s16, 3
    %p114 = por %p112, %p113
    %p116 = scmp.ne.s32.totalorder %s101, %s115
    %p117 = scmp.eq.s32.totalorder %s16, 0
    %p118 = por %p116, %p117
    %s119 = ssub.s32 %s17, %s29
    %s120 = ssub.s32 %s18, %s25
    %s121 = sor.u32 %s119, %s120
    %p122 = scmp.eq.s32.totalorder %s121, 0
    %s124 = sadd.s32 %s123, 1
    %s125 = scalar_select %p122, %s123, %s124
    %p128 = pneg %p122
    %p129 = scmp.eq.s32.totalorder %s10, 3
    %p130 = por %p128, %p129
    %p131 = scmp.ne.s32.totalorder %s123, %s126
    %p132 = scmp.eq.s32.totalorder %s10, 0
    %p133 = por %p131, %p132
    %p134 = scmp.ne.s32.totalorder %s123, %s126
    %p135 = scmp.eq.s32.totalorder %s15, 3
    %p136 = por %p134, %p135
    %p137 = scmp.ne.s32.totalorder %s126, %s127
    %p138 = scmp.eq.s32.totalorder %s15, 0
    %p139 = por %p137, %p138
    %p140 = scmp.ne.s32.totalorder %s126, %s127
    %p141 = scmp.eq.s32.totalorder %s16, 3
    %p142 = por %p140, %p141
    %p144 = scmp.ne.s32.totalorder %s127, %s143
    %p145 = scmp.eq.s32.totalorder %s16, 0
    %p146 = por %p144, %p145
    %p147 = scmp.le.s32.totalorder 1, %s10
    %p148 = scmp.lt.s32.totalorder %s10, 5
    %p149 = pnand %p147, %p148
    %p150 = pneg %p149
    // Predicated region
    $region9: #{tpu_custom_call.1} parent=5 // pred_check
      _
    $region10: #{tpu_custom_call.1} parent=5 // pred_check_branch
      %152 = sbr.rel (%p149) target = $region12
    $region11: #{tpu_custom_call.1} parent=5 // pred_region
      %s153 = ssub.s32 %s10, 1
      // Predicated region
      $region13: #{tpu_custom_call.1} parent=11 // pred_check
        %p154 = pneg %p69
      $region14: #{tpu_custom_call.1} parent=11 // pred_check_branch
        %156 = sbr.rel (%p154) target = $region16
      $region15: #{tpu_custom_call.1} parent=11 // pred_region
        _
      $region16: #{tpu_custom_call.1} parent=11 // pred_fallthru
        _
      // Predicated region
      $region17: #{tpu_custom_call.1} parent=11 // pred_check
        %p157 = pneg %p90
      $region18: #{tpu_custom_call.1} parent=11 // pred_check_branch
        %159 = sbr.rel (%p157) target = $region20
      $region19: #{tpu_custom_call.1} parent=11 // pred_region
        _
      $region20: #{tpu_custom_call.1} parent=11 // pred_fallthru
        _
      // Predicated region
      $region21: #{tpu_custom_call.1} parent=11 // pred_check
        %p160 = pneg %p111
      $region22: #{tpu_custom_call.1} parent=11 // pred_check_branch
        %162 = sbr.rel (%p160) target = $region24
      $region23: #{tpu_custom_call.1} parent=11 // pred_region
        _
      $region24: #{tpu_custom_call.1} parent=11 // pred_fallthru
        _
    $region12: #{tpu_custom_call.1} parent=5 // pred_fallthru
      _
    %p163 = scmp.lt.s32.totalorder %s10, 4
    // Predicated region
    $region25: #{tpu_custom_call.1} parent=5 // pred_check
      %p164 = pneg %p163
    $region26: #{tpu_custom_call.1} parent=5 // pred_check_branch
      %166 = sbr.rel (%p164) target = $region28
    $region27: #{tpu_custom_call.1} parent=5 // pred_region
      // Predicated region
      $region29: #{tpu_custom_call.1} parent=27 // pred_check
        %p167 = pneg %p42
      $region30: #{tpu_custom_call.1} parent=27 // pred_check_branch
        %169 = sbr.rel (%p167) target = $region32
      $region31: #{tpu_custom_call.1} parent=27 // pred_region
        %p170 = scmp.lt.s32.totalorder %s17, 1
        %s171 = scalar_select %p170, %s17, 1
        %s172 = smul.addr %s171, 36
        %s173 = smul.addr %s172, 8
        %s174 = scalar_lea.vmem %s0, %s173
      $region32: #{tpu_custom_call.1} parent=27 // pred_fallthru
        _
    $region28: #{tpu_custom_call.1} parent=5 // pred_fallthru
      _
    %p175 = scmp.le.s32.totalorder 1, %s10
    %p176 = scmp.lt.s32.totalorder %s10, 5
    %p177 = pnand %p175, %p176
    %p178 = pneg %p177
    // Predicated region
    $region33: #{tpu_custom_call.1} parent=5 // pred_check
      _
    $region34: #{tpu_custom_call.1} parent=5 // pred_check_branch
      %180 = sbr.rel (%p177) target = $region36
    $region35: #{tpu_custom_call.1} parent=5 // pred_region
      %s181 = ssub.s32 %s10, 1
      %p182 = scmp.lt.s32.totalorder %s19, 1
      %s183 = scalar_select %p182, %s19, 1
      %s184 = smul.addr %s183, 36
      %s185 = smul.addr %s184, 8
      %s186 = scalar_lea.vmem %s0, %s185
      %p187 = pneg %p48
      %p188 = pneg %p45
      %p189 = pneg %p69
      %p190 = pneg %p66
      %p191 = pneg %p90
      %p192 = pneg %p87
      %p193 = pneg %p111
      %p194 = pneg %p108
      %p195 = pneg %p139
      %p196 = pneg %p136
      %s197 = smul.u32 8, %s20
      %p198 = scmp.lt.s32.totalorder %s19, 1
      %s199 = scalar_select %p198, %s19, 1
      %p200 = scmp.lt.s32.totalorder %s197, 15
      %s201 = scalar_select %p200, %s197, 15
      %s202 = smul.addr %s201, 2
      %s203 = smul.addr %s199, 32
      %s204 = sadd.s32 %s202, %s203
      %s205 = smul.addr %s204, 8
      %s206 = scalar_lea.vmem %s4, %s205
      %p207 = scmp.lt.s32.totalorder %s19, 1
      %s208 = scalar_select %p207, %s19, 1
      %s209 = smul.addr %s208, 36
      %s210 = smul.addr %s209, 8
      %s211 = scalar_lea.vmem %s0, %s210
      %s212 = smul.u32 8, %s20
      %p213 = scmp.lt.s32.totalorder %s19, 1
      %s214 = scalar_select %p213, %s19, 1
      %p215 = scmp.lt.s32.totalorder %s212, 15
      %s216 = scalar_select %p215, %s212, 15
      %s217 = smul.addr %s216, 2
      %s218 = smul.addr %s214, 32
      %s219 = sadd.s32 %s217, %s218
      %s220 = smul.addr %s219, 8
      %s221 = scalar_lea.vmem %s4, %s220
      %s222 = smul.u32 8, %s20
      %s223 = smul.u32 %s20, 8
      %s224 = smul.u32 %s223, 16
      %s225 = scalar_lea.vmem %s211, %s224
      %v226 = vld [vmem:[%s225] sm:$0xff]
      %v227 = vld [vmem:[%s225 + $0x8] sm:$0xff]
      %v228 = vld [vmem:[%s225 + $0x10] sm:$0xff]
      %v229 = vld [vmem:[%s225 + $0x18] sm:$0xff]
      %v230 = vld [vmem:[%s225 + $0x20] sm:$0xff]
      %v231 = vld [vmem:[%s225 + $0x28] sm:$0xff]
      %v232 = vld [vmem:[%s225 + $0x30] sm:$0xff]
      %v233 = vld [vmem:[%s225 + $0x38] sm:$0xff]
      %v234 = vld [vmem:[%s225 + $0x40] sm:$0xff]
      %v235 = vld [vmem:[%s225 + $0x48] sm:$0xff]
      %v236 = vld [vmem:[%s225 + $0x50] sm:$0xff]
      %v237 = vld [vmem:[%s225 + $0x58] sm:$0xff]
      %v238 = vld [vmem:[%s225 + $0x60] sm:$0xff]
      %v239 = vld [vmem:[%s225 + $0x68] sm:$0xff]
      %v240 = vld [vmem:[%s225 + $0x70] sm:$0xff]
      %v241 = vld [vmem:[%s225 + $0x78] sm:$0xff]
      %v242 = vld [vmem:[%s225 + $0x80] sm:$0xff]
      %v243 = vld [vmem:[%s225 + $0x88] sm:$0xff]
      %v244 = vld [vmem:[%s225 + $0x90] sm:$0xff]
      %v245 = vld [vmem:[%s225 + $0x98] sm:$0xff]
      %v246 = vld [vmem:[%s1] sm:$0xf]
      %vm247 = vcmask 31744
      %v249 = vsel %vm247, %v226, 0
      %v252 = vsel %vm247, %v227, 0
      %v255 = vsel %vm247, %v228, 0
      %v258 = vsel %vm247, %v229, 0
      %v261 = vsel %vm247, %v230, 0
      %v264 = vsel %vm247, %v231, 0
      %v267 = vsel %vm247, %v232, 0
      %v270 = vsel %vm247, %v233, 0
      %v273 = vsel %vm247, %v234, 0
      %v276 = vsel %vm247, %v235, 0
      %v279 = vsel %vm247, %v236, 0
      %v282 = vsel %vm247, %v237, 0
      %v285 = vsel %vm247, %v238, 0
      %v288 = vsel %vm247, %v239, 0
      %v291 = vsel %vm247, %v240, 0
      %v294 = vsel %vm247, %v241, 0
      %v297 = vsel %vm247, %v242, 0
      %v300 = vsel %vm247, %v243, 0
      %v303 = vsel %vm247, %v244, 0
      %v306 = vsel %vm247, %v245, 0
      %vm308 = vcmask 1043456
      %v310 = vsel %vm308, %v246, 0
      %312 = vmatpush.msra.mxu0 0.0
      %313 = vmatpush.msra.mxu0 0.0
      %314 = vmatpush.msra.mxu0 0.0
      %315 = vmatpush.msra.mxu0 0.0
      %316 = vmatpush.msra.mxu0 0.0
      %317 = vmatpush.msra.mxu0 0.0
      %318 = vmatpush.msra.mxu0 0.0
      %319 = vmatpush.msra.mxu0 0.0
      %320 = vmatpush.msra.mxu0 0.0
      %321 = vmatpush.msra.mxu0 0.0
      %322 = vmatpush.msra.mxu0 0.0
      %323 = vmatpush.msra.mxu0 0.0
      %324 = vmatpush.msra.mxu0 0.0
      %325 = vmatpush.msra.mxu0 0.0
      %326 = vmatpush.msra.mxu0 0.0
      %327 = vmatpush.msra.mxu0 %v310
      %328 = vmatmul.f32.gmra.mxu0 %v249
      %v329 = vpop.f32.mrf.mxu0
      %v330 = vadd.f32 0.0, %v329
      %331 = vmatmul.f32.gmra.mxu0 %v252
      %v332 = vpop.f32.mrf.mxu0
      %v333 = vadd.f32 0.0, %v332
      %334 = vmatmul.f32.gmra.mxu0 %v255
      %v335 = vpop.f32.mrf.mxu0
      %v336 = vadd.f32 0.0, %v335
      %337 = vmatmul.f32.gmra.mxu0 %v258
      %v338 = vpop.f32.mrf.mxu0
      %v339 = vadd.f32 0.0, %v338
      %340 = vmatmul.f32.gmra.mxu0 %v261
      %v341 = vpop.f32.mrf.mxu0
      %v342 = vadd.f32 0.0, %v341
      %343 = vmatmul.f32.gmra.mxu0 %v264
      %v344 = vpop.f32.mrf.mxu0
      %v345 = vadd.f32 0.0, %v344
      %346 = vmatmul.f32.gmra.mxu0 %v267
      %v347 = vpop.f32.mrf.mxu0
      %v348 = vadd.f32 0.0, %v347
      %349 = vmatmul.f32.gmra.mxu0 %v270
      %v350 = vpop.f32.mrf.mxu0
      %v351 = vadd.f32 0.0, %v350
      %352 = vmatmul.f32.gmra.mxu0 %v273
      %v353 = vpop.f32.mrf.mxu0
      %v354 = vadd.f32 0.0, %v353
      %355 = vmatmul.f32.gmra.mxu0 %v276
      %v356 = vpop.f32.mrf.mxu0
      %v357 = vadd.f32 0.0, %v356
      %358 = vmatmul.f32.gmra.mxu0 %v279
      %v359 = vpop.f32.mrf.mxu0
      %v360 = vadd.f32 0.0, %v359
      %361 = vmatmul.f32.gmra.mxu0 %v282
      %v362 = vpop.f32.mrf.mxu0
      %v363 = vadd.f32 0.0, %v362
      %364 = vmatmul.f32.gmra.mxu0 %v285
      %v365 = vpop.f32.mrf.mxu0
      %v366 = vadd.f32 0.0, %v365
      %367 = vmatmul.f32.gmra.mxu0 %v288
      %v368 = vpop.f32.mrf.mxu0
      %v369 = vadd.f32 0.0, %v368
      %370 = vmatmul.f32.gmra.mxu0 %v291
      %v371 = vpop.f32.mrf.mxu0
      %v372 = vadd.f32 0.0, %v371
      %373 = vmatmul.f32.gmra.mxu0 %v294
      %v374 = vpop.f32.mrf.mxu0
      %v375 = vadd.f32 0.0, %v374
      %376 = vmatmul.f32.gmra.mxu0 %v297
      %v377 = vpop.f32.mrf.mxu0
      %v378 = vadd.f32 0.0, %v377
      %379 = vmatmul.f32.gmra.mxu0 %v300
      %v380 = vpop.f32.mrf.mxu0
      %v381 = vadd.f32 0.0, %v380
      %382 = vmatmul.f32.gmra.mxu0 %v303
      %v383 = vpop.f32.mrf.mxu0
      %v384 = vadd.f32 0.0, %v383
      %385 = vmatmul.f32.gmra.mxu0 %v306
      %v386 = vpop.f32.mrf.mxu0
      %v387 = vadd.f32 0.0, %v386
      %388 = vdwg.mxu0
      %v389 = vmul.f32 %v330, 0.5
      %v390 = vmul.f32 %v333, 0.5
      %v391 = vmul.f32 %v336, 0.5
      %v392 = vmul.f32 %v339, 0.5
      %v393 = vmul.f32 %v342, 0.5
      %v394 = vmul.f32 %v345, 0.5
      %v395 = vmul.f32 %v348, 0.5
      %v396 = vmul.f32 %v351, 0.5
      %v397 = vmul.f32 %v354, 0.5
      %v398 = vmul.f32 %v357, 0.5
      %v399 = vmul.f32 %v360, 0.5
      %v400 = vmul.f32 %v363, 0.5
      %v401 = vmul.f32 %v366, 0.5
      %v402 = vmul.f32 %v369, 0.5
      %v403 = vmul.f32 %v372, 0.5
      %v404 = vmul.f32 %v375, 0.5
      %v405 = vmul.f32 %v378, 0.5
      %v406 = vmul.f32 %v381, 0.5
      %v407 = vmul.f32 %v384, 0.5
      %v408 = vmul.f32 %v387, 0.5
      %v409 = vmul.f32 %v330, 0.70710677
      %v410 = vmul.f32 %v333, 0.70710677
      %v411 = vmul.f32 %v336, 0.70710677
      %v412 = vmul.f32 %v339, 0.70710677
      %v413 = vmul.f32 %v342, 0.70710677
      %v414 = vmul.f32 %v345, 0.70710677
      %v415 = vmul.f32 %v348, 0.70710677
      %v416 = vmul.f32 %v351, 0.70710677
      %v417 = vmul.f32 %v354, 0.70710677
      %v418 = vmul.f32 %v357, 0.70710677
      %v419 = vmul.f32 %v360, 0.70710677
      %v420 = vmul.f32 %v363, 0.70710677
      %v421 = vmul.f32 %v366, 0.70710677
      %v422 = vmul.f32 %v369, 0.70710677
      %v423 = vmul.f32 %v372, 0.70710677
      %v424 = vmul.f32 %v375, 0.70710677
      %v425 = vmul.f32 %v378, 0.70710677
      %v426 = vmul.f32 %v381, 0.70710677
      %v427 = vmul.f32 %v384, 0.70710677
      %v428 = vmul.f32 %v387, 0.70710677
      %v429 = vmul.f32 %v409, %v409
      %v430 = vmin.f32 16.0, %v429
      %v431 = vmul.f32 %v430, 2.1237322e-06
      %v432 = vadd.f32 %v431, 0.00028619796
      %v433 = vmul.f32 %v430, %v432
      %v434 = vadd.f32 %v433, 0.0036580483
      %v435 = vmul.f32 %v430, %v434
      %v436 = vadd.f32 %v435, 0.05243302
      %v437 = vmul.f32 %v430, %v436
      %v438 = vadd.f32 %v437, 0.18741608
      %v439 = vmul.f32 %v430, %v438
      %v440 = vadd.f32 %v439, 1.1283791
      %v441 = vmul.f32 %v409, %v440
      %v442 = vmul.f32 %v430, 3.8918573e-05
      %v443 = vadd.f32 %v442, 0.001143296
      %v444 = vmul.f32 %v430, %v443
      %v445 = vadd.f32 %v444, 0.014752088
      %v446 = vmul.f32 %v430, %v445
      %v447 = vadd.f32 %v446, 0.112945676
      %v448 = vmul.f32 %v430, %v447
      %v449 = vadd.f32 %v448, 0.4994258
      %v450 = vmul.f32 %v430, %v449
      %v451 = vadd.f32 %v450, 1.0
      %v452 = vrcp.pop %v451
      %v453 = vmul.f32 %v451, %v452
      %v454 = vsub.f32 1.0, %v453
      %v455 = vmul.f32 %v452, %v454
      %v456 = vadd.f32 %v452, %v455
      %vm457 = vweird.f32 %v451
      %vm458 = vweird.f32 %v452
      %vm459 = vmor %vm457, %vm458
      %v460 = vsel %vm459, %v452, %v456
      %v461 = vand.u32 2147483647, %v451
      %vm462 = vcmp.eq.f32.partialorder %v461, 8.507059e+37
      %v463 = vand.u32 %v451, 2147483648
      %v464 = vor.u32 1.1754944e-38, %v463
      %v465 = vsel %vm462, %v464, %v460
      %v466 = vmul.f32 %v441, %v465
      %v467 = vmin.f32 %v466, 1.0
      %v468 = vmax.f32 %v467, -1.0
      %v469 = vmul.f32 %v410, %v410
      %v470 = vmin.f32 16.0, %v469
      %v471 = vmul.f32 %v470, 2.1237322e-06
      %v472 = vadd.f32 %v471, 0.00028619796
      %v473 = vmul.f32 %v470, %v472
      %v474 = vadd.f32 %v473, 0.0036580483
      %v475 = vmul.f32 %v470, %v474
      %v476 = vadd.f32 %v475, 0.05243302
      %v477 = vmul.f32 %v470, %v476
      %v478 = vadd.f32 %v477, 0.18741608
      %v479 = vmul.f32 %v470, %v478
      %v480 = vadd.f32 %v479, 1.1283791
      %v481 = vmul.f32 %v410, %v480
      %v482 = vmul.f32 %v470, 3.8918573e-05
      %v483 = vadd.f32 %v482, 0.001143296
      %v484 = vmul.f32 %v470, %v483
      %v485 = vadd.f32 %v484, 0.014752088
      %v486 = vmul.f32 %v470, %v485
      %v487 = vadd.f32 %v486, 0.112945676
      %v488 = vmul.f32 %v470, %v487
      %v489 = vadd.f32 %v488, 0.4994258
      %v490 = vmul.f32 %v470, %v489
      %v491 = vadd.f32 %v490, 1.0
      %v492 = vrcp.pop %v491
      %v493 = vmul.f32 %v491, %v492
      %v494 = vsub.f32 1.0, %v493
      %v495 = vmul.f32 %v492, %v494
      %v496 = vadd.f32 %v492, %v495
      %vm497 = vweird.f32 %v491
      %vm498 = vweird.f32 %v492
      %vm499 = vmor %vm497, %vm498
      %v500 = vsel %vm499, %v492, %v496
      %v501 = vand.u32 2147483647, %v491
      %vm502 = vcmp.eq.f32.partialorder %v501, 8.507059e+37
      %v503 = vand.u32 %v491, 2147483648
      %v504 = vor.u32 1.1754944e-38, %v503
      %v505 = vsel %vm502, %v504, %v500
      %v506 = vmul.f32 %v481, %v505
      %v507 = vmin.f32 %v506, 1.0
      %v508 = vmax.f32 %v507, -1.0
      %v509 = vmul.f32 %v411, %v411
      %v510 = vmin.f32 16.0, %v509
      %v511 = vmul.f32 %v510, 2.1237322e-06
      %v512 = vadd.f32 %v511, 0.00028619796
      %v513 = vmul.f32 %v510, %v512
      %v514 = vadd.f32 %v513, 0.0036580483
      %v515 = vmul.f32 %v510, %v514
      %v516 = vadd.f32 %v515, 0.05243302
      %v517 = vmul.f32 %v510, %v516
      %v518 = vadd.f32 %v517, 0.18741608
      %v519 = vmul.f32 %v510, %v518
      %v520 = vadd.f32 %v519, 1.1283791
      %v521 = vmul.f32 %v411, %v520
      %v522 = vmul.f32 %v510, 3.8918573e-05
      %v523 = vadd.f32 %v522, 0.001143296
      %v524 = vmul.f32 %v510, %v523
      %v525 = vadd.f32 %v524, 0.014752088
      %v526 = vmul.f32 %v510, %v525
      %v527 = vadd.f32 %v526, 0.112945676
      %v528 = vmul.f32 %v510, %v527
      %v529 = vadd.f32 %v528, 0.4994258
      %v530 = vmul.f32 %v510, %v529
      %v531 = vadd.f32 %v530, 1.0
      %v532 = vrcp.pop %v531
      %v533 = vmul.f32 %v531, %v532
      %v534 = vsub.f32 1.0, %v533
      %v535 = vmul.f32 %v532, %v534
      %v536 = vadd.f32 %v532, %v535
      %vm537 = vweird.f32 %v531
      %vm538 = vweird.f32 %v532
      %vm539 = vmor %vm537, %vm538
      %v540 = vsel %vm539, %v532, %v536
      %v541 = vand.u32 2147483647, %v531
      %vm542 = vcmp.eq.f32.partialorder %v541, 8.507059e+37
      %v543 = vand.u32 %v531, 2147483648
      %v544 = vor.u32 1.1754944e-38, %v543
      %v545 = vsel %vm542, %v544, %v540
      %v546 = vmul.f32 %v521, %v545
      %v547 = vmin.f32 %v546, 1.0
      %v548 = vmax.f32 %v547, -1.0
      %v549 = vmul.f32 %v412, %v412
      %v550 = vmin.f32 16.0, %v549
      %v551 = vmul.f32 %v550, 2.1237322e-06
      %v552 = vadd.f32 %v551, 0.00028619796
      %v553 = vmul.f32 %v550, %v552
      %v554 = vadd.f32 %v553, 0.0036580483
      %v555 = vmul.f32 %v550, %v554
      %v556 = vadd.f32 %v555, 0.05243302
      %v557 = vmul.f32 %v550, %v556
      %v558 = vadd.f32 %v557, 0.18741608
      %v559 = vmul.f32 %v550, %v558
      %v560 = vadd.f32 %v559, 1.1283791
      %v561 = vmul.f32 %v412, %v560
      %v562 = vmul.f32 %v550, 3.8918573e-05
      %v563 = vadd.f32 %v562, 0.001143296
      %v564 = vmul.f32 %v550, %v563
      %v565 = vadd.f32 %v564, 0.014752088
      %v566 = vmul.f32 %v550, %v565
      %v567 = vadd.f32 %v566, 0.112945676
      %v568 = vmul.f32 %v550, %v567
      %v569 = vadd.f32 %v568, 0.4994258
      %v570 = vmul.f32 %v550, %v569
      %v571 = vadd.f32 %v570, 1.0
      %v572 = vrcp.pop %v571
      %v573 = vmul.f32 %v571, %v572
      %v574 = vsub.f32 1.0, %v573
      %v575 = vmul.f32 %v572, %v574
      %v576 = vadd.f32 %v572, %v575
      %vm577 = vweird.f32 %v571
      %vm578 = vweird.f32 %v572
      %vm579 = vmor %vm577, %vm578
      %v580 = vsel %vm579, %v572, %v576
      %v581 = vand.u32 2147483647, %v571
      %vm582 = vcmp.eq.f32.partialorder %v581, 8.507059e+37
      %v583 = vand.u32 %v571, 2147483648
      %v584 = vor.u32 1.1754944e-38, %v583
      %v585 = vsel %vm582, %v584, %v580
      %v586 = vmul.f32 %v561, %v585
      %v587 = vmin.f32 %v586, 1.0
      %v588 = vmax.f32 %v587, -1.0
      %v589 = vmul.f32 %v413, %v413
      %v590 = vmin.f32 16.0, %v589
      %v591 = vmul.f32 %v590, 2.1237322e-06
      %v592 = vadd.f32 %v591, 0.00028619796
      %v593 = vmul.f32 %v590, %v592
      %v594 = vadd.f32 %v593, 0.0036580483
      %v595 = vmul.f32 %v590, %v594
      %v596 = vadd.f32 %v595, 0.05243302
      %v597 = vmul.f32 %v590, %v596
      %v598 = vadd.f32 %v597, 0.18741608
      %v599 = vmul.f32 %v590, %v598
      %v600 = vadd.f32 %v599, 1.1283791
      %v601 = vmul.f32 %v413, %v600
      %v602 = vmul.f32 %v590, 3.8918573e-05
      %v603 = vadd.f32 %v602, 0.001143296
      %v604 = vmul.f32 %v590, %v603
      %v605 = vadd.f32 %v604, 0.014752088
      %v606 = vmul.f32 %v590, %v605
      %v607 = vadd.f32 %v606, 0.112945676
      %v608 = vmul.f32 %v590, %v607
      %v609 = vadd.f32 %v608, 0.4994258
      %v610 = vmul.f32 %v590, %v609
      %v611 = vadd.f32 %v610, 1.0
      %v612 = vrcp.pop %v611
      %v613 = vmul.f32 %v611, %v612
      %v614 = vsub.f32 1.0, %v613
      %v615 = vmul.f32 %v612, %v614
      %v616 = vadd.f32 %v612, %v615
      %vm617 = vweird.f32 %v611
      %vm618 = vweird.f32 %v612
      %vm619 = vmor %vm617, %vm618
      %v620 = vsel %vm619, %v612, %v616
      %v621 = vand.u32 2147483647, %v611
      %vm622 = vcmp.eq.f32.partialorder %v621, 8.507059e+37
      %v623 = vand.u32 %v611, 2147483648
      %v624 = vor.u32 1.1754944e-38, %v623
      %v625 = vsel %vm622, %v624, %v620
      %v626 = vmul.f32 %v601, %v625
      %v627 = vmin.f32 %v626, 1.0
      %v628 = vmax.f32 %v627, -1.0
      %v629 = vmul.f32 %v414, %v414
      %v630 = vmin.f32 16.0, %v629
      %v631 = vmul.f32 %v630, 2.1237322e-06
      %v632 = vadd.f32 %v631, 0.00028619796
      %v633 = vmul.f32 %v630, %v632
      %v634 = vadd.f32 %v633, 0.0036580483
      %v635 = vmul.f32 %v630, %v634
      %v636 = vadd.f32 %v635, 0.05243302
      %v637 = vmul.f32 %v630, %v636
      %v638 = vadd.f32 %v637, 0.18741608
      %v639 = vmul.f32 %v630, %v638
      %v640 = vadd.f32 %v639, 1.1283791
      %v641 = vmul.f32 %v414, %v640
      %v642 = vmul.f32 %v630, 3.8918573e-05
      %v643 = vadd.f32 %v642, 0.001143296
      %v644 = vmul.f32 %v630, %v643
      %v645 = vadd.f32 %v644, 0.014752088
      %v646 = vmul.f32 %v630, %v645
      %v647 = vadd.f32 %v646, 0.112945676
      %v648 = vmul.f32 %v630, %v647
      %v649 = vadd.f32 %v648, 0.4994258
      %v650 = vmul.f32 %v630, %v649
      %v651 = vadd.f32 %v650, 1.0
      %v652 = vrcp.pop %v651
      %v653 = vmul.f32 %v651, %v652
      %v654 = vsub.f32 1.0, %v653
      %v655 = vmul.f32 %v652, %v654
      %v656 = vadd.f32 %v652, %v655
      %vm657 = vweird.f32 %v651
      %vm658 = vweird.f32 %v652
      %vm659 = vmor %vm657, %vm658
      %v660 = vsel %vm659, %v652, %v656
      %v661 = vand.u32 2147483647, %v651
      %vm662 = vcmp.eq.f32.partialorder %v661, 8.507059e+37
      %v663 = vand.u32 %v651, 2147483648
      %v664 = vor.u32 1.1754944e-38, %v663
      %v665 = vsel %vm662, %v664, %v660
      %v666 = vmul.f32 %v641, %v665
      %v667 = vmin.f32 %v666, 1.0
      %v668 = vmax.f32 %v667, -1.0
      %v669 = vmul.f32 %v415, %v415
      %v670 = vmin.f32 16.0, %v669
      %v671 = vmul.f32 %v670, 2.1237322e-06
      %v672 = vadd.f32 %v671, 0.00028619796
      %v673 = vmul.f32 %v670, %v672
      %v674 = vadd.f32 %v673, 0.0036580483
      %v675 = vmul.f32 %v670, %v674
      %v676 = vadd.f32 %v675, 0.05243302
      %v677 = vmul.f32 %v670, %v676
      %v678 = vadd.f32 %v677, 0.18741608
      %v679 = vmul.f32 %v670, %v678
      %v680 = vadd.f32 %v679, 1.1283791
      %v681 = vmul.f32 %v415, %v680
      %v682 = vmul.f32 %v670, 3.8918573e-05
      %v683 = vadd.f32 %v682, 0.001143296
      %v684 = vmul.f32 %v670, %v683
      %v685 = vadd.f32 %v684, 0.014752088
      %v686 = vmul.f32 %v670, %v685
      %v687 = vadd.f32 %v686, 0.112945676
      %v688 = vmul.f32 %v670, %v687
      %v689 = vadd.f32 %v688, 0.4994258
      %v690 = vmul.f32 %v670, %v689
      %v691 = vadd.f32 %v690, 1.0
      %v692 = vrcp.pop %v691
      %v693 = vmul.f32 %v691, %v692
      %v694 = vsub.f32 1.0, %v693
      %v695 = vmul.f32 %v692, %v694
      %v696 = vadd.f32 %v692, %v695
      %vm697 = vweird.f32 %v691
      %vm698 = vweird.f32 %v692
      %vm699 = vmor %vm697, %vm698
      %v700 = vsel %vm699, %v692, %v696
      %v701 = vand.u32 2147483647, %v691
      %vm702 = vcmp.eq.f32.partialorder %v701, 8.507059e+37
      %v703 = vand.u32 %v691, 2147483648
      %v704 = vor.u32 1.1754944e-38, %v703
      %v705 = vsel %vm702, %v704, %v700
      %v706 = vmul.f32 %v681, %v705
      %v707 = vmin.f32 %v706, 1.0
      %v708 = vmax.f32 %v707, -1.0
      %v709 = vmul.f32 %v416, %v416
      %v710 = vmin.f32 16.0, %v709
      %v711 = vmul.f32 %v710, 2.1237322e-06
      %v712 = vadd.f32 %v711, 0.00028619796
      %v713 = vmul.f32 %v710, %v712
      %v714 = vadd.f32 %v713, 0.0036580483
      %v715 = vmul.f32 %v710, %v714
      %v716 = vadd.f32 %v715, 0.05243302
      %v717 = vmul.f32 %v710, %v716
      %v718 = vadd.f32 %v717, 0.18741608
      %v719 = vmul.f32 %v710, %v718
      %v720 = vadd.f32 %v719, 1.1283791
      %v721 = vmul.f32 %v416, %v720
      %v722 = vmul.f32 %v710, 3.8918573e-05
      %v723 = vadd.f32 %v722, 0.001143296
      %v724 = vmul.f32 %v710, %v723
      %v725 = vadd.f32 %v724, 0.014752088
      %v726 = vmul.f32 %v710, %v725
      %v727 = vadd.f32 %v726, 0.112945676
      %v728 = vmul.f32 %v710, %v727
      %v729 = vadd.f32 %v728, 0.4994258
      %v730 = vmul.f32 %v710, %v729
      %v731 = vadd.f32 %v730, 1.0
      %v732 = vrcp.pop %v731
      %v733 = vmul.f32 %v731, %v732
      %v734 = vsub.f32 1.0, %v733
      %v735 = vmul.f32 %v732, %v734
      %v736 = vadd.f32 %v732, %v735
      %vm737 = vweird.f32 %v731
      %vm738 = vweird.f32 %v732
      %vm739 = vmor %vm737, %vm738
      %v740 = vsel %vm739, %v732, %v736
      %v741 = vand.u32 2147483647, %v731
      %vm742 = vcmp.eq.f32.partialorder %v741, 8.507059e+37
      %v743 = vand.u32 %v731, 2147483648
      %v744 = vor.u32 1.1754944e-38, %v743
      %v745 = vsel %vm742, %v744, %v740
      %v746 = vmul.f32 %v721, %v745
      %v747 = vmin.f32 %v746, 1.0
      %v748 = vmax.f32 %v747, -1.0
      %v749 = vmul.f32 %v417, %v417
      %v750 = vmin.f32 16.0, %v749
      %v751 = vmul.f32 %v750, 2.1237322e-06
      %v752 = vadd.f32 %v751, 0.00028619796
      %v753 = vmul.f32 %v750, %v752
      %v754 = vadd.f32 %v753, 0.0036580483
      %v755 = vmul.f32 %v750, %v754
      %v756 = vadd.f32 %v755, 0.05243302
      %v757 = vmul.f32 %v750, %v756
      %v758 = vadd.f32 %v757, 0.18741608
      %v759 = vmul.f32 %v750, %v758
      %v760 = vadd.f32 %v759, 1.1283791
      %v761 = vmul.f32 %v417, %v760
      %v762 = vmul.f32 %v750, 3.8918573e-05
      %v763 = vadd.f32 %v762, 0.001143296
      %v764 = vmul.f32 %v750, %v763
      %v765 = vadd.f32 %v764, 0.014752088
      %v766 = vmul.f32 %v750, %v765
      %v767 = vadd.f32 %v766, 0.112945676
      %v768 = vmul.f32 %v750, %v767
      %v769 = vadd.f32 %v768, 0.4994258
      %v770 = vmul.f32 %v750, %v769
      %v771 = vadd.f32 %v770, 1.0
      %v772 = vrcp.pop %v771
      %v773 = vmul.f32 %v771, %v772
      %v774 = vsub.f32 1.0, %v773
      %v775 = vmul.f32 %v772, %v774
      %v776 = vadd.f32 %v772, %v775
      %vm777 = vweird.f32 %v771
      %vm778 = vweird.f32 %v772
      %vm779 = vmor %vm777, %vm778
      %v780 = vsel %vm779, %v772, %v776
      %v781 = vand.u32 2147483647, %v771
      %vm782 = vcmp.eq.f32.partialorder %v781, 8.507059e+37
      %v783 = vand.u32 %v771, 2147483648
      %v784 = vor.u32 1.1754944e-38, %v783
      %v785 = vsel %vm782, %v784, %v780
      %v786 = vmul.f32 %v761, %v785
      %v787 = vmin.f32 %v786, 1.0
      %v788 = vmax.f32 %v787, -1.0
      %v789 = vmul.f32 %v418, %v418
      %v790 = vmin.f32 16.0, %v789
      %v791 = vmul.f32 %v790, 2.1237322e-06
      %v792 = vadd.f32 %v791, 0.00028619796
      %v793 = vmul.f32 %v790, %v792
      %v794 = vadd.f32 %v793, 0.0036580483
      %v795 = vmul.f32 %v790, %v794
      %v796 = vadd.f32 %v795, 0.05243302
      %v797 = vmul.f32 %v790, %v796
      %v798 = vadd.f32 %v797, 0.18741608
      %v799 = vmul.f32 %v790, %v798
      %v800 = vadd.f32 %v799, 1.1283791
      %v801 = vmul.f32 %v418, %v800
      %v802 = vmul.f32 %v790, 3.8918573e-05
      %v803 = vadd.f32 %v802, 0.001143296
      %v804 = vmul.f32 %v790, %v803
      %v805 = vadd.f32 %v804, 0.014752088
      %v806 = vmul.f32 %v790, %v805
      %v807 = vadd.f32 %v806, 0.112945676
      %v808 = vmul.f32 %v790, %v807
      %v809 = vadd.f32 %v808, 0.4994258
      %v810 = vmul.f32 %v790, %v809
      %v811 = vadd.f32 %v810, 1.0
      %v812 = vrcp.pop %v811
      %v813 = vmul.f32 %v811, %v812
      %v814 = vsub.f32 1.0, %v813
      %v815 = vmul.f32 %v812, %v814
      %v816 = vadd.f32 %v812, %v815
      %vm817 = vweird.f32 %v811
      %vm818 = vweird.f32 %v812
      %vm819 = vmor %vm817, %vm818
      %v820 = vsel %vm819, %v812, %v816
      %v821 = vand.u32 2147483647, %v811
      %vm822 = vcmp.eq.f32.partialorder %v821, 8.507059e+37
      %v823 = vand.u32 %v811, 2147483648
      %v824 = vor.u32 1.1754944e-38, %v823
      %v825 = vsel %vm822, %v824, %v820
      %v826 = vmul.f32 %v801, %v825
      %v827 = vmin.f32 %v826, 1.0
      %v828 = vmax.f32 %v827, -1.0
      %v829 = vmul.f32 %v419, %v419
      %v830 = vmin.f32 16.0, %v829
      %v831 = vmul.f32 %v830, 2.1237322e-06
      %v832 = vadd.f32 %v831, 0.00028619796
      %v833 = vmul.f32 %v830, %v832
      %v834 = vadd.f32 %v833, 0.0036580483
      %v835 = vmul.f32 %v830, %v834
      %v836 = vadd.f32 %v835, 0.05243302
      %v837 = vmul.f32 %v830, %v836
      %v838 = vadd.f32 %v837, 0.18741608
      %v839 = vmul.f32 %v830, %v838
      %v840 = vadd.f32 %v839, 1.1283791
      %v841 = vmul.f32 %v419, %v840
      %v842 = vmul.f32 %v830, 3.8918573e-05
      %v843 = vadd.f32 %v842, 0.001143296
      %v844 = vmul.f32 %v830, %v843
      %v845 = vadd.f32 %v844, 0.014752088
      %v846 = vmul.f32 %v830, %v845
      %v847 = vadd.f32 %v846, 0.112945676
      %v848 = vmul.f32 %v830, %v847
      %v849 = vadd.f32 %v848, 0.4994258
      %v850 = vmul.f32 %v830, %v849
      %v851 = vadd.f32 %v850, 1.0
      %v852 = vrcp.pop %v851
      %v853 = vmul.f32 %v851, %v852
      %v854 = vsub.f32 1.0, %v853
      %v855 = vmul.f32 %v852, %v854
      %v856 = vadd.f32 %v852, %v855
      %vm857 = vweird.f32 %v851
      %vm858 = vweird.f32 %v852
      %vm859 = vmor %vm857, %vm858
      %v860 = vsel %vm859, %v852, %v856
      %v861 = vand.u32 2147483647, %v851
      %vm862 = vcmp.eq.f32.partialorder %v861, 8.507059e+37
      %v863 = vand.u32 %v851, 2147483648
      %v864 = vor.u32 1.1754944e-38, %v863
      %v865 = vsel %vm862, %v864, %v860
      %v866 = vmul.f32 %v841, %v865
      %v867 = vmin.f32 %v866, 1.0
      %v868 = vmax.f32 %v867, -1.0
      %v869 = vmul.f32 %v420, %v420
      %v870 = vmin.f32 16.0, %v869
      %v871 = vmul.f32 %v870, 2.1237322e-06
      %v872 = vadd.f32 %v871, 0.00028619796
      %v873 = vmul.f32 %v870, %v872
      %v874 = vadd.f32 %v873, 0.0036580483
      %v875 = vmul.f32 %v870, %v874
      %v876 = vadd.f32 %v875, 0.05243302
      %v877 = vmul.f32 %v870, %v876
      %v878 = vadd.f32 %v877, 0.18741608
      %v879 = vmul.f32 %v870, %v878
      %v880 = vadd.f32 %v879, 1.1283791
      %v881 = vmul.f32 %v420, %v880
      %v882 = vmul.f32 %v870, 3.8918573e-05
      %v883 = vadd.f32 %v882, 0.001143296
      %v884 = vmul.f32 %v870, %v883
      %v885 = vadd.f32 %v884, 0.014752088
      %v886 = vmul.f32 %v870, %v885
      %v887 = vadd.f32 %v886, 0.112945676
      %v888 = vmul.f32 %v870, %v887
      %v889 = vadd.f32 %v888, 0.4994258
      %v890 = vmul.f32 %v870, %v889
      %v891 = vadd.f32 %v890, 1.0
      %v892 = vrcp.pop %v891
      %v893 = vmul.f32 %v891, %v892
      %v894 = vsub.f32 1.0, %v893
      %v895 = vmul.f32 %v892, %v894
      %v896 = vadd.f32 %v892, %v895
      %vm897 = vweird.f32 %v891
      %vm898 = vweird.f32 %v892
      %vm899 = vmor %vm897, %vm898
      %v900 = vsel %vm899, %v892, %v896
      %v901 = vand.u32 2147483647, %v891
      %vm902 = vcmp.eq.f32.partialorder %v901, 8.507059e+37
      %v903 = vand.u32 %v891, 2147483648
      %v904 = vor.u32 1.1754944e-38, %v903
      %v905 = vsel %vm902, %v904, %v900
      %v906 = vmul.f32 %v881, %v905
      %v907 = vmin.f32 %v906, 1.0
      %v908 = vmax.f32 %v907, -1.0
      %v909 = vmul.f32 %v421, %v421
      %v910 = vmin.f32 16.0, %v909
      %v911 = vmul.f32 %v910, 2.1237322e-06
      %v912 = vadd.f32 %v911, 0.00028619796
      %v913 = vmul.f32 %v910, %v912
      %v914 = vadd.f32 %v913, 0.0036580483
      %v915 = vmul.f32 %v910, %v914
      %v916 = vadd.f32 %v915, 0.05243302
      %v917 = vmul.f32 %v910, %v916
      %v918 = vadd.f32 %v917, 0.18741608
      %v919 = vmul.f32 %v910, %v918
      %v920 = vadd.f32 %v919, 1.1283791
      %v921 = vmul.f32 %v421, %v920
      %v922 = vmul.f32 %v910, 3.8918573e-05
      %v923 = vadd.f32 %v922, 0.001143296
      %v924 = vmul.f32 %v910, %v923
      %v925 = vadd.f32 %v924, 0.014752088
      %v926 = vmul.f32 %v910, %v925
      %v927 = vadd.f32 %v926, 0.112945676
      %v928 = vmul.f32 %v910, %v927
      %v929 = vadd.f32 %v928, 0.4994258
      %v930 = vmul.f32 %v910, %v929
      %v931 = vadd.f32 %v930, 1.0
      %v932 = vrcp.pop %v931
      %v933 = vmul.f32 %v931, %v932
      %v934 = vsub.f32 1.0, %v933
      %v935 = vmul.f32 %v932, %v934
      %v936 = vadd.f32 %v932, %v935
      %vm937 = vweird.f32 %v931
      %vm938 = vweird.f32 %v932
      %vm939 = vmor %vm937, %vm938
      %v940 = vsel %vm939, %v932, %v936
      %v941 = vand.u32 2147483647, %v931
      %vm942 = vcmp.eq.f32.partialorder %v941, 8.507059e+37
      %v943 = vand.u32 %v931, 2147483648
      %v944 = vor.u32 1.1754944e-38, %v943
      %v945 = vsel %vm942, %v944, %v940
      %v946 = vmul.f32 %v921, %v945
      %v947 = vmin.f32 %v946, 1.0
      %v948 = vmax.f32 %v947, -1.0
      %v949 = vmul.f32 %v422, %v422
      %v950 = vmin.f32 16.0, %v949
      %v951 = vmul.f32 %v950, 2.1237322e-06
      %v952 = vadd.f32 %v951, 0.00028619796
      %v953 = vmul.f32 %v950, %v952
      %v954 = vadd.f32 %v953, 0.0036580483
      %v955 = vmul.f32 %v950, %v954
      %v956 = vadd.f32 %v955, 0.05243302
      %v957 = vmul.f32 %v950, %v956
      %v958 = vadd.f32 %v957, 0.18741608
      %v959 = vmul.f32 %v950, %v958
      %v960 = vadd.f32 %v959, 1.1283791
      %v961 = vmul.f32 %v422, %v960
      %v962 = vmul.f32 %v950, 3.8918573e-05
      %v963 = vadd.f32 %v962, 0.001143296
      %v964 = vmul.f32 %v950, %v963
      %v965 = vadd.f32 %v964, 0.014752088
      %v966 = vmul.f32 %v950, %v965
      %v967 = vadd.f32 %v966, 0.112945676
      %v968 = vmul.f32 %v950, %v967
      %v969 = vadd.f32 %v968, 0.4994258
      %v970 = vmul.f32 %v950, %v969
      %v971 = vadd.f32 %v970, 1.0
      %v972 = vrcp.pop %v971
      %v973 = vmul.f32 %v971, %v972
      %v974 = vsub.f32 1.0, %v973
      %v975 = vmul.f32 %v972, %v974
      %v976 = vadd.f32 %v972, %v975
      %vm977 = vweird.f32 %v971
      %vm978 = vweird.f32 %v972
      %vm979 = vmor %vm977, %vm978
      %v980 = vsel %vm979, %v972, %v976
      %v981 = vand.u32 2147483647, %v971
      %vm982 = vcmp.eq.f32.partialorder %v981, 8.507059e+37
      %v983 = vand.u32 %v971, 2147483648
      %v984 = vor.u32 1.1754944e-38, %v983
      %v985 = vsel %vm982, %v984, %v980
      %v986 = vmul.f32 %v961, %v985
      %v987 = vmin.f32 %v986, 1.0
      %v988 = vmax.f32 %v987, -1.0
      %v989 = vmul.f32 %v423, %v423
      %v990 = vmin.f32 16.0, %v989
      %v991 = vmul.f32 %v990, 2.1237322e-06
      %v992 = vadd.f32 %v991, 0.00028619796
      %v993 = vmul.f32 %v990, %v992
      %v994 = vadd.f32 %v993, 0.0036580483
      %v995 = vmul.f32 %v990, %v994
      %v996 = vadd.f32 %v995, 0.05243302
      %v997 = vmul.f32 %v990, %v996
      %v998 = vadd.f32 %v997, 0.18741608
      %v999 = vmul.f32 %v990, %v998
      %v1000 = vadd.f32 %v999, 1.1283791
      %v1001 = vmul.f32 %v423, %v1000
      %v1002 = vmul.f32 %v990, 3.8918573e-05
      %v1003 = vadd.f32 %v1002, 0.001143296
      %v1004 = vmul.f32 %v990, %v1003
      %v1005 = vadd.f32 %v1004, 0.014752088
      %v1006 = vmul.f32 %v990, %v1005
      %v1007 = vadd.f32 %v1006, 0.112945676
      %v1008 = vmul.f32 %v990, %v1007
      %v1009 = vadd.f32 %v1008, 0.4994258
      %v1010 = vmul.f32 %v990, %v1009
      %v1011 = vadd.f32 %v1010, 1.0
      %v1012 = vrcp.pop %v1011
      %v1013 = vmul.f32 %v1011, %v1012
      %v1014 = vsub.f32 1.0, %v1013
      %v1015 = vmul.f32 %v1012, %v1014
      %v1016 = vadd.f32 %v1012, %v1015
      %vm1017 = vweird.f32 %v1011
      %vm1018 = vweird.f32 %v1012
      %vm1019 = vmor %vm1017, %vm1018
      %v1020 = vsel %vm1019, %v1012, %v1016
      %v1021 = vand.u32 2147483647, %v1011
      %vm1022 = vcmp.eq.f32.partialorder %v1021, 8.507059e+37
      %v1023 = vand.u32 %v1011, 2147483648
      %v1024 = vor.u32 1.1754944e-38, %v1023
      %v1025 = vsel %vm1022, %v1024, %v1020
      %v1026 = vmul.f32 %v1001, %v1025
      %v1027 = vmin.f32 %v1026, 1.0
      %v1028 = vmax.f32 %v1027, -1.0
      %v1029 = vmul.f32 %v424, %v424
      %v1030 = vmin.f32 16.0, %v1029
      %v1031 = vmul.f32 %v1030, 2.1237322e-06
      %v1032 = vadd.f32 %v1031, 0.00028619796
      %v1033 = vmul.f32 %v1030, %v1032
      %v1034 = vadd.f32 %v1033, 0.0036580483
      %v1035 = vmul.f32 %v1030, %v1034
      %v1036 = vadd.f32 %v1035, 0.05243302
      %v1037 = vmul.f32 %v1030, %v1036
      %v1038 = vadd.f32 %v1037, 0.18741608
      %v1039 = vmul.f32 %v1030, %v1038
      %v1040 = vadd.f32 %v1039, 1.1283791
      %v1041 = vmul.f32 %v424, %v1040
      %v1042 = vmul.f32 %v1030, 3.8918573e-05
      %v1043 = vadd.f32 %v1042, 0.001143296
      %v1044 = vmul.f32 %v1030, %v1043
      %v1045 = vadd.f32 %v1044, 0.014752088
      %v1046 = vmul.f32 %v1030, %v1045
      %v1047 = vadd.f32 %v1046, 0.112945676
      %v1048 = vmul.f32 %v1030, %v1047
      %v1049 = vadd.f32 %v1048, 0.4994258
      %v1050 = vmul.f32 %v1030, %v1049
      %v1051 = vadd.f32 %v1050, 1.0
      %v1052 = vrcp.pop %v1051
      %v1053 = vmul.f32 %v1051, %v1052
      %v1054 = vsub.f32 1.0, %v1053
      %v1055 = vmul.f32 %v1052, %v1054
      %v1056 = vadd.f32 %v1052, %v1055
      %vm1057 = vweird.f32 %v1051
      %vm1058 = vweird.f32 %v1052
      %vm1059 = vmor %vm1057, %vm1058
      %v1060 = vsel %vm1059, %v1052, %v1056
      %v1061 = vand.u32 2147483647, %v1051
      %vm1062 = vcmp.eq.f32.partialorder %v1061, 8.507059e+37
      %v1063 = vand.u32 %v1051, 2147483648
      %v1064 = vor.u32 1.1754944e-38, %v1063
      %v1065 = vsel %vm1062, %v1064, %v1060
      %v1066 = vmul.f32 %v1041, %v1065
      %v1067 = vmin.f32 %v1066, 1.0
      %v1068 = vmax.f32 %v1067, -1.0
      %v1069 = vmul.f32 %v425, %v425
      %v1070 = vmin.f32 16.0, %v1069
      %v1071 = vmul.f32 %v1070, 2.1237322e-06
      %v1072 = vadd.f32 %v1071, 0.00028619796
      %v1073 = vmul.f32 %v1070, %v1072
      %v1074 = vadd.f32 %v1073, 0.0036580483
      %v1075 = vmul.f32 %v1070, %v1074
      %v1076 = vadd.f32 %v1075, 0.05243302
      %v1077 = vmul.f32 %v1070, %v1076
      %v1078 = vadd.f32 %v1077, 0.18741608
      %v1079 = vmul.f32 %v1070, %v1078
      %v1080 = vadd.f32 %v1079, 1.1283791
      %v1081 = vmul.f32 %v425, %v1080
      %v1082 = vmul.f32 %v1070, 3.8918573e-05
      %v1083 = vadd.f32 %v1082, 0.001143296
      %v1084 = vmul.f32 %v1070, %v1083
      %v1085 = vadd.f32 %v1084, 0.014752088
      %v1086 = vmul.f32 %v1070, %v1085
      %v1087 = vadd.f32 %v1086, 0.112945676
      %v1088 = vmul.f32 %v1070, %v1087
      %v1089 = vadd.f32 %v1088, 0.4994258
      %v1090 = vmul.f32 %v1070, %v1089
      %v1091 = vadd.f32 %v1090, 1.0
      %v1092 = vrcp.pop %v1091
      %v1093 = vmul.f32 %v1091, %v1092
      %v1094 = vsub.f32 1.0, %v1093
      %v1095 = vmul.f32 %v1092, %v1094
      %v1096 = vadd.f32 %v1092, %v1095
      %vm1097 = vweird.f32 %v1091
      %vm1098 = vweird.f32 %v1092
      %vm1099 = vmor %vm1097, %vm1098
      %v1100 = vsel %vm1099, %v1092, %v1096
      %v1101 = vand.u32 2147483647, %v1091
      %vm1102 = vcmp.eq.f32.partialorder %v1101, 8.507059e+37
      %v1103 = vand.u32 %v1091, 2147483648
      %v1104 = vor.u32 1.1754944e-38, %v1103
      %v1105 = vsel %vm1102, %v1104, %v1100
      %v1106 = vmul.f32 %v1081, %v1105
      %v1107 = vmin.f32 %v1106, 1.0
      %v1108 = vmax.f32 %v1107, -1.0
      %v1109 = vmul.f32 %v426, %v426
      %v1110 = vmin.f32 16.0, %v1109
      %v1111 = vmul.f32 %v1110, 2.1237322e-06
      %v1112 = vadd.f32 %v1111, 0.00028619796
      %v1113 = vmul.f32 %v1110, %v1112
      %v1114 = vadd.f32 %v1113, 0.0036580483
      %v1115 = vmul.f32 %v1110, %v1114
      %v1116 = vadd.f32 %v1115, 0.05243302
      %v1117 = vmul.f32 %v1110, %v1116
      %v1118 = vadd.f32 %v1117, 0.18741608
      %v1119 = vmul.f32 %v1110, %v1118
      %v1120 = vadd.f32 %v1119, 1.1283791
      %v1121 = vmul.f32 %v426, %v1120
      %v1122 = vmul.f32 %v1110, 3.8918573e-05
      %v1123 = vadd.f32 %v1122, 0.001143296
      %v1124 = vmul.f32 %v1110, %v1123
      %v1125 = vadd.f32 %v1124, 0.014752088
      %v1126 = vmul.f32 %v1110, %v1125
      %v1127 = vadd.f32 %v1126, 0.112945676
      %v1128 = vmul.f32 %v1110, %v1127
      %v1129 = vadd.f32 %v1128, 0.4994258
      %v1130 = vmul.f32 %v1110, %v1129
      %v1131 = vadd.f32 %v1130, 1.0
      %v1132 = vrcp.pop %v1131
      %v1133 = vmul.f32 %v1131, %v1132
      %v1134 = vsub.f32 1.0, %v1133
      %v1135 = vmul.f32 %v1132, %v1134
      %v1136 = vadd.f32 %v1132, %v1135
      %vm1137 = vweird.f32 %v1131
      %vm1138 = vweird.f32 %v1132
      %vm1139 = vmor %vm1137, %vm1138
      %v1140 = vsel %vm1139, %v1132, %v1136
      %v1141 = vand.u32 2147483647, %v1131
      %vm1142 = vcmp.eq.f32.partialorder %v1141, 8.507059e+37
      %v1143 = vand.u32 %v1131, 2147483648
      %v1144 = vor.u32 1.1754944e-38, %v1143
      %v1145 = vsel %vm1142, %v1144, %v1140
      %v1146 = vmul.f32 %v1121, %v1145
      %v1147 = vmin.f32 %v1146, 1.0
      %v1148 = vmax.f32 %v1147, -1.0
      %v1149 = vmul.f32 %v427, %v427
      %v1150 = vmin.f32 16.0, %v1149
      %v1151 = vmul.f32 %v1150, 2.1237322e-06
      %v1152 = vadd.f32 %v1151, 0.00028619796
      %v1153 = vmul.f32 %v1150, %v1152
      %v1154 = vadd.f32 %v1153, 0.0036580483
      %v1155 = vmul.f32 %v1150, %v1154
      %v1156 = vadd.f32 %v1155, 0.05243302
      %v1157 = vmul.f32 %v1150, %v1156
      %v1158 = vadd.f32 %v1157, 0.18741608
      %v1159 = vmul.f32 %v1150, %v1158
      %v1160 = vadd.f32 %v1159, 1.1283791
      %v1161 = vmul.f32 %v427, %v1160
      %v1162 = vmul.f32 %v1150, 3.8918573e-05
      %v1163 = vadd.f32 %v1162, 0.001143296
      %v1164 = vmul.f32 %v1150, %v1163
      %v1165 = vadd.f32 %v1164, 0.014752088
      %v1166 = vmul.f32 %v1150, %v1165
      %v1167 = vadd.f32 %v1166, 0.112945676
      %v1168 = vmul.f32 %v1150, %v1167
      %v1169 = vadd.f32 %v1168, 0.4994258
      %v1170 = vmul.f32 %v1150, %v1169
      %v1171 = vadd.f32 %v1170, 1.0
      %v1172 = vrcp.pop %v1171
      %v1173 = vmul.f32 %v1171, %v1172
      %v1174 = vsub.f32 1.0, %v1173
      %v1175 = vmul.f32 %v1172, %v1174
      %v1176 = vadd.f32 %v1172, %v1175
      %vm1177 = vweird.f32 %v1171
      %vm1178 = vweird.f32 %v1172
      %vm1179 = vmor %vm1177, %vm1178
      %v1180 = vsel %vm1179, %v1172, %v1176
      %v1181 = vand.u32 2147483647, %v1171
      %vm1182 = vcmp.eq.f32.partialorder %v1181, 8.507059e+37
      %v1183 = vand.u32 %v1171, 2147483648
      %v1184 = vor.u32 1.1754944e-38, %v1183
      %v1185 = vsel %vm1182, %v1184, %v1180
      %v1186 = vmul.f32 %v1161, %v1185
      %v1187 = vmin.f32 %v1186, 1.0
      %v1188 = vmax.f32 %v1187, -1.0
      %v1189 = vmul.f32 %v428, %v428
      %v1190 = vmin.f32 16.0, %v1189
      %v1191 = vmul.f32 %v1190, 2.1237322e-06
      %v1192 = vadd.f32 %v1191, 0.00028619796
      %v1193 = vmul.f32 %v1190, %v1192
      %v1194 = vadd.f32 %v1193, 0.0036580483
      %v1195 = vmul.f32 %v1190, %v1194
      %v1196 = vadd.f32 %v1195, 0.05243302
      %v1197 = vmul.f32 %v1190, %v1196
      %v1198 = vadd.f32 %v1197, 0.18741608
      %v1199 = vmul.f32 %v1190, %v1198
      %v1200 = vadd.f32 %v1199, 1.1283791
      %v1201 = vmul.f32 %v428, %v1200
      %v1202 = vmul.f32 %v1190, 3.8918573e-05
      %v1203 = vadd.f32 %v1202, 0.001143296
      %v1204 = vmul.f32 %v1190, %v1203
      %v1205 = vadd.f32 %v1204, 0.014752088
      %v1206 = vmul.f32 %v1190, %v1205
      %v1207 = vadd.f32 %v1206, 0.112945676
      %v1208 = vmul.f32 %v1190, %v1207
      %v1209 = vadd.f32 %v1208, 0.4994258
      %v1210 = vmul.f32 %v1190, %v1209
      %v1211 = vadd.f32 %v1210, 1.0
      %v1212 = vrcp.pop %v1211
      %v1213 = vmul.f32 %v1211, %v1212
      %v1214 = vsub.f32 1.0, %v1213
      %v1215 = vmul.f32 %v1212, %v1214
      %v1216 = vadd.f32 %v1212, %v1215
      %vm1217 = vweird.f32 %v1211
      %vm1218 = vweird.f32 %v1212
      %vm1219 = vmor %vm1217, %vm1218
      %v1220 = vsel %vm1219, %v1212, %v1216
      %v1221 = vand.u32 2147483647, %v1211
      %vm1222 = vcmp.eq.f32.partialorder %v1221, 8.507059e+37
      %v1223 = vand.u32 %v1211, 2147483648
      %v1224 = vor.u32 1.1754944e-38, %v1223
      %v1225 = vsel %vm1222, %v1224, %v1220
      %v1226 = vmul.f32 %v1201, %v1225
      %v1227 = vmin.f32 %v1226, 1.0
      %v1228 = vmax.f32 %v1227, -1.0
      %v1229 = vadd.f32 %v468, 1.0
      %v1230 = vadd.f32 %v508, 1.0
      %v1231 = vadd.f32 %v548, 1.0
      %v1232 = vadd.f32 %v588, 1.0
      %v1233 = vadd.f32 %v628, 1.0
      %v1234 = vadd.f32 %v668, 1.0
      %v1235 = vadd.f32 %v708, 1.0
      %v1236 = vadd.f32 %v748, 1.0
      %v1237 = vadd.f32 %v788, 1.0
      %v1238 = vadd.f32 %v828, 1.0
      %v1239 = vadd.f32 %v868, 1.0
      %v1240 = vadd.f32 %v908, 1.0
      %v1241 = vadd.f32 %v948, 1.0
      %v1242 = vadd.f32 %v988, 1.0
      %v1243 = vadd.f32 %v1028, 1.0
      %v1244 = vadd.f32 %v1068, 1.0
      %v1245 = vadd.f32 %v1108, 1.0
      %v1246 = vadd.f32 %v1148, 1.0
      %v1247 = vadd.f32 %v1188, 1.0
      %v1248 = vadd.f32 %v1228, 1.0
      %v1249 = vmul.f32 %v389, %v1229
      %v1250 = vmul.f32 %v390, %v1230
      %v1251 = vmul.f32 %v391, %v1231
      %v1252 = vmul.f32 %v392, %v1232
      %v1253 = vmul.f32 %v393, %v1233
      %v1254 = vmul.f32 %v394, %v1234
      %v1255 = vmul.f32 %v395, %v1235
      %v1256 = vmul.f32 %v396, %v1236
      %v1257 = vmul.f32 %v397, %v1237
      %v1258 = vmul.f32 %v398, %v1238
      %v1259 = vmul.f32 %v399, %v1239
      %v1260 = vmul.f32 %v400, %v1240
      %v1261 = vmul.f32 %v401, %v1241
      %v1262 = vmul.f32 %v402, %v1242
      %v1263 = vmul.f32 %v403, %v1243
      %v1264 = vmul.f32 %v404, %v1244
      %v1265 = vmul.f32 %v405, %v1245
      %v1266 = vmul.f32 %v406, %v1246
      %v1267 = vmul.f32 %v407, %v1247
      %v1268 = vmul.f32 %v408, %v1248
      %v1269 = vld [vmem:[%s2] sm:$0x7]
      %v1270 = vld [vmem:[%s2 + $0x4] sm:$0x7]
      %v1271 = vld [vmem:[%s2 + $0x8] sm:$0x7]
      %v1272 = vperm.slane %v1269, 0
      %v1273 = vmul.f32 %v1272, %v1249
      %v1274 = vmul.f32 %v1272, %v1250
      %v1275 = vmul.f32 %v1272, %v1251
      %v1276 = vmul.f32 %v1272, %v1252
      %v1277 = vmul.f32 %v1272, %v1253
      %v1278 = vmul.f32 %v1272, %v1254
      %v1279 = vmul.f32 %v1272, %v1255
      %v1280 = vmul.f32 %v1272, %v1256
      %v1281 = vmul.f32 %v1272, %v1257
      %v1282 = vmul.f32 %v1272, %v1258
      %v1283 = vmul.f32 %v1272, %v1259
      %v1284 = vmul.f32 %v1272, %v1260
      %v1285 = vmul.f32 %v1272, %v1261
      %v1286 = vmul.f32 %v1272, %v1262
      %v1287 = vmul.f32 %v1272, %v1263
      %v1288 = vmul.f32 %v1272, %v1264
      %v1289 = vperm.slane %v1270, 0
      %v1290 = vmul.f32 %v1289, %v1251
      %v1291 = vmul.f32 %v1289, %v1252
      %v1292 = vmul.f32 %v1289, %v1253
      %v1293 = vmul.f32 %v1289, %v1254
      %v1294 = vmul.f32 %v1289, %v1255
      %v1295 = vmul.f32 %v1289, %v1256
      %v1296 = vmul.f32 %v1289, %v1257
      %v1297 = vmul.f32 %v1289, %v1258
      %v1298 = vmul.f32 %v1289, %v1259
      %v1299 = vmul.f32 %v1289, %v1260
      %v1300 = vmul.f32 %v1289, %v1261
      %v1301 = vmul.f32 %v1289, %v1262
      %v1302 = vmul.f32 %v1289, %v1263
      %v1303 = vmul.f32 %v1289, %v1264
      %v1304 = vmul.f32 %v1289, %v1265
      %v1305 = vmul.f32 %v1289, %v1266
      %v1306 = vadd.f32 %v1273, %v1290
      %v1307 = vadd.f32 %v1274, %v1291
      %v1308 = vadd.f32 %v1275, %v1292
      %v1309 = vadd.f32 %v1276, %v1293
      %v1310 = vadd.f32 %v1277, %v1294
      %v1311 = vadd.f32 %v1278, %v1295
      %v1312 = vadd.f32 %v1279, %v1296
      %v1313 = vadd.f32 %v1280, %v1297
      %v1314 = vadd.f32 %v1281, %v1298
      %v1315 = vadd.f32 %v1282, %v1299
      %v1316 = vadd.f32 %v1283, %v1300
      %v1317 = vadd.f32 %v1284, %v1301
      %v1318 = vadd.f32 %v1285, %v1302
      %v1319 = vadd.f32 %v1286, %v1303
      %v1320 = vadd.f32 %v1287, %v1304
      %v1321 = vadd.f32 %v1288, %v1305
      %v1322 = vperm.slane %v1271, 0
      %v1323 = vmul.f32 %v1322, %v1253
      %v1324 = vmul.f32 %v1322, %v1254
      %v1325 = vmul.f32 %v1322, %v1255
      %v1326 = vmul.f32 %v1322, %v1256
      %v1327 = vmul.f32 %v1322, %v1257
      %v1328 = vmul.f32 %v1322, %v1258
      %v1329 = vmul.f32 %v1322, %v1259
      %v1330 = vmul.f32 %v1322, %v1260
      %v1331 = vmul.f32 %v1322, %v1261
      %v1332 = vmul.f32 %v1322, %v1262
      %v1333 = vmul.f32 %v1322, %v1263
      %v1334 = vmul.f32 %v1322, %v1264
      %v1335 = vmul.f32 %v1322, %v1265
      %v1336 = vmul.f32 %v1322, %v1266
      %v1337 = vmul.f32 %v1322, %v1267
      %v1338 = vmul.f32 %v1322, %v1268
      %v1339 = vadd.f32 %v1306, %v1323
      %v1340 = vadd.f32 %v1307, %v1324
      %v1341 = vadd.f32 %v1308, %v1325
      %v1342 = vadd.f32 %v1309, %v1326
      %v1343 = vadd.f32 %v1310, %v1327
      %v1344 = vadd.f32 %v1311, %v1328
      %v1345 = vadd.f32 %v1312, %v1329
      %v1346 = vadd.f32 %v1313, %v1330
      %v1347 = vadd.f32 %v1314, %v1331
      %v1348 = vadd.f32 %v1315, %v1332
      %v1349 = vadd.f32 %v1316, %v1333
      %v1350 = vadd.f32 %v1317, %v1334
      %v1351 = vadd.f32 %v1318, %v1335
      %v1352 = vadd.f32 %v1319, %v1336
      %v1353 = vadd.f32 %v1320, %v1337
      %v1354 = vadd.f32 %v1321, %v1338
      %v1355 = vperm.slane %v1269, 1
      %v1356 = vmul.f32 %v1355, %v1249
      %v1357 = vmul.f32 %v1355, %v1250
      %v1358 = vmul.f32 %v1355, %v1251
      %v1359 = vmul.f32 %v1355, %v1252
      %v1360 = vmul.f32 %v1355, %v1253
      %v1361 = vmul.f32 %v1355, %v1254
      %v1362 = vmul.f32 %v1355, %v1255
      %v1363 = vmul.f32 %v1355, %v1256
      %v1364 = vmul.f32 %v1355, %v1257
      %v1365 = vmul.f32 %v1355, %v1258
      %v1366 = vmul.f32 %v1355, %v1259
      %v1367 = vmul.f32 %v1355, %v1260
      %v1368 = vmul.f32 %v1355, %v1261
      %v1369 = vmul.f32 %v1355, %v1262
      %v1370 = vmul.f32 %v1355, %v1263
      %v1371 = vmul.f32 %v1355, %v1264
      %v1372 = vperm.slane %v1270, 1
      %v1373 = vmul.f32 %v1372, %v1251
      %v1374 = vmul.f32 %v1372, %v1252
      %v1375 = vmul.f32 %v1372, %v1253
      %v1376 = vmul.f32 %v1372, %v1254
      %v1377 = vmul.f32 %v1372, %v1255
      %v1378 = vmul.f32 %v1372, %v1256
      %v1379 = vmul.f32 %v1372, %v1257
      %v1380 = vmul.f32 %v1372, %v1258
      %v1381 = vmul.f32 %v1372, %v1259
      %v1382 = vmul.f32 %v1372, %v1260
      %v1383 = vmul.f32 %v1372, %v1261
      %v1384 = vmul.f32 %v1372, %v1262
      %v1385 = vmul.f32 %v1372, %v1263
      %v1386 = vmul.f32 %v1372, %v1264
      %v1387 = vmul.f32 %v1372, %v1265
      %v1388 = vmul.f32 %v1372, %v1266
      %v1389 = vadd.f32 %v1356, %v1373
      %v1390 = vadd.f32 %v1357, %v1374
      %v1391 = vadd.f32 %v1358, %v1375
      %v1392 = vadd.f32 %v1359, %v1376
      %v1393 = vadd.f32 %v1360, %v1377
      %v1394 = vadd.f32 %v1361, %v1378
      %v1395 = vadd.f32 %v1362, %v1379
      %v1396 = vadd.f32 %v1363, %v1380
      %v1397 = vadd.f32 %v1364, %v1381
      %v1398 = vadd.f32 %v1365, %v1382
      %v1399 = vadd.f32 %v1366, %v1383
      %v1400 = vadd.f32 %v1367, %v1384
      %v1401 = vadd.f32 %v1368, %v1385
      %v1402 = vadd.f32 %v1369, %v1386
      %v1403 = vadd.f32 %v1370, %v1387
      %v1404 = vadd.f32 %v1371, %v1388
      %v1405 = vperm.slane %v1271, 1
      %v1406 = vmul.f32 %v1405, %v1253
      %v1407 = vmul.f32 %v1405, %v1254
      %v1408 = vmul.f32 %v1405, %v1255
      %v1409 = vmul.f32 %v1405, %v1256
      %v1410 = vmul.f32 %v1405, %v1257
      %v1411 = vmul.f32 %v1405, %v1258
      %v1412 = vmul.f32 %v1405, %v1259
      %v1413 = vmul.f32 %v1405, %v1260
      %v1414 = vmul.f32 %v1405, %v1261
      %v1415 = vmul.f32 %v1405, %v1262
      %v1416 = vmul.f32 %v1405, %v1263
      %v1417 = vmul.f32 %v1405, %v1264
      %v1418 = vmul.f32 %v1405, %v1265
      %v1419 = vmul.f32 %v1405, %v1266
      %v1420 = vmul.f32 %v1405, %v1267
      %v1421 = vmul.f32 %v1405, %v1268
      %v1422 = vadd.f32 %v1389, %v1406
      %v1423 = vadd.f32 %v1390, %v1407
      %v1424 = vadd.f32 %v1391, %v1408
      %v1425 = vadd.f32 %v1392, %v1409
      %v1426 = vadd.f32 %v1393, %v1410
      %v1427 = vadd.f32 %v1394, %v1411
      %v1428 = vadd.f32 %v1395, %v1412
      %v1429 = vadd.f32 %v1396, %v1413
      %v1430 = vadd.f32 %v1397, %v1414
      %v1431 = vadd.f32 %v1398, %v1415
      %v1432 = vadd.f32 %v1399, %v1416
      %v1433 = vadd.f32 %v1400, %v1417
      %v1434 = vadd.f32 %v1401, %v1418
      %v1435 = vadd.f32 %v1402, %v1419
      %v1436 = vadd.f32 %v1403, %v1420
      %v1437 = vadd.f32 %v1404, %v1421
      %v1438 = vperm.slane %v1269, 2
      %v1439 = vmul.f32 %v1438, %v1249
      %v1440 = vmul.f32 %v1438, %v1250
      %v1441 = vmul.f32 %v1438, %v1251
      %v1442 = vmul.f32 %v1438, %v1252
      %v1443 = vmul.f32 %v1438, %v1253
      %v1444 = vmul.f32 %v1438, %v1254
      %v1445 = vmul.f32 %v1438, %v1255
      %v1446 = vmul.f32 %v1438, %v1256
      %v1447 = vmul.f32 %v1438, %v1257
      %v1448 = vmul.f32 %v1438, %v1258
      %v1449 = vmul.f32 %v1438, %v1259
      %v1450 = vmul.f32 %v1438, %v1260
      %v1451 = vmul.f32 %v1438, %v1261
      %v1452 = vmul.f32 %v1438, %v1262
      %v1453 = vmul.f32 %v1438, %v1263
      %v1454 = vmul.f32 %v1438, %v1264
      %v1455 = vperm.slane %v1270, 2
      %v1456 = vmul.f32 %v1455, %v1251
      %v1457 = vmul.f32 %v1455, %v1252
      %v1458 = vmul.f32 %v1455, %v1253
      %v1459 = vmul.f32 %v1455, %v1254
      %v1460 = vmul.f32 %v1455, %v1255
      %v1461 = vmul.f32 %v1455, %v1256
      %v1462 = vmul.f32 %v1455, %v1257
      %v1463 = vmul.f32 %v1455, %v1258
      %v1464 = vmul.f32 %v1455, %v1259
      %v1465 = vmul.f32 %v1455, %v1260
      %v1466 = vmul.f32 %v1455, %v1261
      %v1467 = vmul.f32 %v1455, %v1262
      %v1468 = vmul.f32 %v1455, %v1263
      %v1469 = vmul.f32 %v1455, %v1264
      %v1470 = vmul.f32 %v1455, %v1265
      %v1471 = vmul.f32 %v1455, %v1266
      %v1472 = vadd.f32 %v1439, %v1456
      %v1473 = vadd.f32 %v1440, %v1457
      %v1474 = vadd.f32 %v1441, %v1458
      %v1475 = vadd.f32 %v1442, %v1459
      %v1476 = vadd.f32 %v1443, %v1460
      %v1477 = vadd.f32 %v1444, %v1461
      %v1478 = vadd.f32 %v1445, %v1462
      %v1479 = vadd.f32 %v1446, %v1463
      %v1480 = vadd.f32 %v1447, %v1464
      %v1481 = vadd.f32 %v1448, %v1465
      %v1482 = vadd.f32 %v1449, %v1466
      %v1483 = vadd.f32 %v1450, %v1467
      %v1484 = vadd.f32 %v1451, %v1468
      %v1485 = vadd.f32 %v1452, %v1469
      %v1486 = vadd.f32 %v1453, %v1470
      %v1487 = vadd.f32 %v1454, %v1471
      %v1488 = vperm.slane %v1271, 2
      %v1489 = vmul.f32 %v1488, %v1253
      %v1490 = vmul.f32 %v1488, %v1254
      %v1491 = vmul.f32 %v1488, %v1255
      %v1492 = vmul.f32 %v1488, %v1256
      %v1493 = vmul.f32 %v1488, %v1257
      %v1494 = vmul.f32 %v1488, %v1258
      %v1495 = vmul.f32 %v1488, %v1259
      %v1496 = vmul.f32 %v1488, %v1260
      %v1497 = vmul.f32 %v1488, %v1261
      %v1498 = vmul.f32 %v1488, %v1262
      %v1499 = vmul.f32 %v1488, %v1263
      %v1500 = vmul.f32 %v1488, %v1264
      %v1501 = vmul.f32 %v1488, %v1265
      %v1502 = vmul.f32 %v1488, %v1266
      %v1503 = vmul.f32 %v1488, %v1267
      %v1504 = vmul.f32 %v1488, %v1268
      %v1505 = vadd.f32 %v1472, %v1489
      %v1506 = vadd.f32 %v1473, %v1490
      %v1507 = vadd.f32 %v1474, %v1491
      %v1508 = vadd.f32 %v1475, %v1492
      %v1509 = vadd.f32 %v1476, %v1493
      %v1510 = vadd.f32 %v1477, %v1494
      %v1511 = vadd.f32 %v1478, %v1495
      %v1512 = vadd.f32 %v1479, %v1496
      %v1513 = vadd.f32 %v1480, %v1497
      %v1514 = vadd.f32 %v1481, %v1498
      %v1515 = vadd.f32 %v1482, %v1499
      %v1516 = vadd.f32 %v1483, %v1500
      %v1517 = vadd.f32 %v1484, %v1501
      %v1518 = vadd.f32 %v1485, %v1502
      %v1519 = vadd.f32 %v1486, %v1503
      %v1520 = vadd.f32 %v1487, %v1504
      %v1521 = vlaneseq
      %v1522 = vshrl.u32 %v1521, 7
      %v1523 = vadd.s32 %v1522, 8
      %v1524 = vadd.s32 %v1522, 16
      %v1525 = vadd.s32 %v1522, 24
      %v1526 = vadd.s32 %v1522, 32
      %v1527 = vadd.s32 %v1522, 40
      %v1528 = vadd.s32 %v1522, 48
      %v1529 = vadd.s32 %v1522, 56
      %v1530 = vadd.s32 %v1522, 64
      %v1531 = vadd.s32 %v1522, 72
      %v1532 = vadd.s32 %v1522, 80
      %v1533 = vadd.s32 %v1522, 88
      %v1534 = vadd.s32 %v1522, 96
      %v1535 = vadd.s32 %v1522, 104
      %v1536 = vadd.s32 %v1522, 112
      %v1537 = vadd.s32 %v1522, 120
      %vm1538 = vcmp.lt.s32.totalorder %v1522, 0
      %v1539 = vsub.s32 0, %v1522
      %v1540 = vsel %vm1538, %v1539, %v1522
      %v1541 = vshrl.u32 %v1540, 4
      %v1542 = vand.u32 %v1540, 15
      %v1543 = vsub.s32 0, %v1542
      %v1544 = vsel %vm1538, %v1543, %v1542
      %vm1545 = vcmp.lt.s32.totalorder %v1523, 0
      %v1546 = vsub.s32 0, %v1523
      %v1547 = vsel %vm1545, %v1546, %v1523
      %v1548 = vshrl.u32 %v1547, 4
      %v1549 = vand.u32 %v1547, 15
      %v1550 = vsub.s32 0, %v1549
      %v1551 = vsel %vm1545, %v1550, %v1549
      %vm1552 = vcmp.lt.s32.totalorder %v1524, 0
      %v1553 = vsub.s32 0, %v1524
      %v1554 = vsel %vm1552, %v1553, %v1524
      %v1555 = vshrl.u32 %v1554, 4
      %v1556 = vand.u32 %v1554, 15
      %v1557 = vsub.s32 0, %v1556
      %v1558 = vsel %vm1552, %v1557, %v1556
      %vm1559 = vcmp.lt.s32.totalorder %v1525, 0
      %v1560 = vsub.s32 0, %v1525
      %v1561 = vsel %vm1559, %v1560, %v1525
      %v1562 = vshrl.u32 %v1561, 4
      %v1563 = vand.u32 %v1561, 15
      %v1564 = vsub.s32 0, %v1563
      %v1565 = vsel %vm1559, %v1564, %v1563
      %vm1566 = vcmp.lt.s32.totalorder %v1526, 0
      %v1567 = vsub.s32 0, %v1526
      %v1568 = vsel %vm1566, %v1567, %v1526
      %v1569 = vshrl.u32 %v1568, 4
      %v1570 = vand.u32 %v1568, 15
      %v1571 = vsub.s32 0, %v1570
      %v1572 = vsel %vm1566, %v1571, %v1570
      %vm1573 = vcmp.lt.s32.totalorder %v1527, 0
      %v1574 = vsub.s32 0, %v1527
      %v1575 = vsel %vm1573, %v1574, %v1527
      %v1576 = vshrl.u32 %v1575, 4
      %v1577 = vand.u32 %v1575, 15
      %v1578 = vsub.s32 0, %v1577
      %v1579 = vsel %vm1573, %v1578, %v1577
      %vm1580 = vcmp.lt.s32.totalorder %v1528, 0
      %v1581 = vsub.s32 0, %v1528
      %v1582 = vsel %vm1580, %v1581, %v1528
      %v1583 = vshrl.u32 %v1582, 4
      %v1584 = vand.u32 %v1582, 15
      %v1585 = vsub.s32 0, %v1584
      %v1586 = vsel %vm1580, %v1585, %v1584
      %vm1587 = vcmp.lt.s32.totalorder %v1529, 0
      %v1588 = vsub.s32 0, %v1529
      %v1589 = vsel %vm1587, %v1588, %v1529
      %v1590 = vshrl.u32 %v1589, 4
      %v1591 = vand.u32 %v1589, 15
      %v1592 = vsub.s32 0, %v1591
      %v1593 = vsel %vm1587, %v1592, %v1591
      %vm1594 = vcmp.lt.s32.totalorder %v1530, 0
      %v1595 = vsub.s32 0, %v1530
      %v1596 = vsel %vm1594, %v1595, %v1530
      %v1597 = vshrl.u32 %v1596, 4
      %v1598 = vand.u32 %v1596, 15
      %v1599 = vsub.s32 0, %v1598
      %v1600 = vsel %vm1594, %v1599, %v1598
      %vm1601 = vcmp.lt.s32.totalorder %v1531, 0
      %v1602 = vsub.s32 0, %v1531
      %v1603 = vsel %vm1601, %v1602, %v1531
      %v1604 = vshrl.u32 %v1603, 4
      %v1605 = vand.u32 %v1603, 15
      %v1606 = vsub.s32 0, %v1605
      %v1607 = vsel %vm1601, %v1606, %v1605
      %vm1608 = vcmp.lt.s32.totalorder %v1532, 0
      %v1609 = vsub.s32 0, %v1532
      %v1610 = vsel %vm1608, %v1609, %v1532
      %v1611 = vshrl.u32 %v1610, 4
      %v1612 = vand.u32 %v1610, 15
      %v1613 = vsub.s32 0, %v1612
      %v1614 = vsel %vm1608, %v1613, %v1612
      %vm1615 = vcmp.lt.s32.totalorder %v1533, 0
      %v1616 = vsub.s32 0, %v1533
      %v1617 = vsel %vm1615, %v1616, %v1533
      %v1618 = vshrl.u32 %v1617, 4
      %v1619 = vand.u32 %v1617, 15
      %v1620 = vsub.s32 0, %v1619
      %v1621 = vsel %vm1615, %v1620, %v1619
      %vm1622 = vcmp.lt.s32.totalorder %v1534, 0
      %v1623 = vsub.s32 0, %v1534
      %v1624 = vsel %vm1622, %v1623, %v1534
      %v1625 = vshrl.u32 %v1624, 4
      %v1626 = vand.u32 %v1624, 15
      %v1627 = vsub.s32 0, %v1626
      %v1628 = vsel %vm1622, %v1627, %v1626
      %vm1629 = vcmp.lt.s32.totalorder %v1535, 0
      %v1630 = vsub.s32 0, %v1535
      %v1631 = vsel %vm1629, %v1630, %v1535
      %v1632 = vshrl.u32 %v1631, 4
      %v1633 = vand.u32 %v1631, 15
      %v1634 = vsub.s32 0, %v1633
      %v1635 = vsel %vm1629, %v1634, %v1633
      %vm1636 = vcmp.lt.s32.totalorder %v1536, 0
      %v1637 = vsub.s32 0, %v1536
      %v1638 = vsel %vm1636, %v1637, %v1536
      %v1639 = vshrl.u32 %v1638, 4
      %v1640 = vand.u32 %v1638, 15
      %v1641 = vsub.s32 0, %v1640
      %v1642 = vsel %vm1636, %v1641, %v1640
      %vm1643 = vcmp.lt.s32.totalorder %v1537, 0
      %v1644 = vsub.s32 0, %v1537
      %v1645 = vsel %vm1643, %v1644, %v1537
      %v1646 = vshrl.u32 %v1645, 4
      %v1647 = vand.u32 %v1645, 15
      %v1648 = vsub.s32 0, %v1647
      %v1649 = vsel %vm1643, %v1648, %v1647
      %vm1650 = vcmp.ne.s32.totalorder %v1544, 0
      %vm1651 = vcmp.ne.s32.totalorder %v1551, 0
      %vm1652 = vcmp.ne.s32.totalorder %v1558, 0
      %vm1653 = vcmp.ne.s32.totalorder %v1565, 0
      %vm1654 = vcmp.ne.s32.totalorder %v1572, 0
      %vm1655 = vcmp.ne.s32.totalorder %v1579, 0
      %vm1656 = vcmp.ne.s32.totalorder %v1586, 0
      %vm1657 = vcmp.ne.s32.totalorder %v1593, 0
      %vm1658 = vcmp.ne.s32.totalorder %v1600, 0
      %vm1659 = vcmp.ne.s32.totalorder %v1607, 0
      %vm1660 = vcmp.ne.s32.totalorder %v1614, 0
      %vm1661 = vcmp.ne.s32.totalorder %v1621, 0
      %vm1662 = vcmp.ne.s32.totalorder %v1628, 0
      %vm1663 = vcmp.ne.s32.totalorder %v1635, 0
      %vm1664 = vcmp.ne.s32.totalorder %v1642, 0
      %vm1665 = vcmp.ne.s32.totalorder %v1649, 0
      %vm1666 = vcmp.lt.s32.totalorder %v1544, 0
      %vm1667 = vcmp.lt.s32.totalorder %v1551, 0
      %vm1668 = vcmp.lt.s32.totalorder %v1558, 0
      %vm1669 = vcmp.lt.s32.totalorder %v1565, 0
      %vm1670 = vcmp.lt.s32.totalorder %v1572, 0
      %vm1671 = vcmp.lt.s32.totalorder %v1579, 0
      %vm1672 = vcmp.lt.s32.totalorder %v1586, 0
      %vm1673 = vcmp.lt.s32.totalorder %v1593, 0
      %vm1674 = vcmp.lt.s32.totalorder %v1600, 0
      %vm1675 = vcmp.lt.s32.totalorder %v1607, 0
      %vm1676 = vcmp.lt.s32.totalorder %v1614, 0
      %vm1677 = vcmp.lt.s32.totalorder %v1621, 0
      %vm1678 = vcmp.lt.s32.totalorder %v1628, 0
      %vm1679 = vcmp.lt.s32.totalorder %v1635, 0
      %vm1680 = vcmp.lt.s32.totalorder %v1642, 0
      %vm1681 = vcmp.lt.s32.totalorder %v1649, 0
      %vm1682 = vmand %vm1666, %vm1650
      %vm1683 = vmand %vm1667, %vm1651
      %vm1684 = vmand %vm1668, %vm1652
      %vm1685 = vmand %vm1669, %vm1653
      %vm1686 = vmand %vm1670, %vm1654
      %vm1687 = vmand %vm1671, %vm1655
      %vm1688 = vmand %vm1672, %vm1656
      %vm1689 = vmand %vm1673, %vm1657
      %vm1690 = vmand %vm1674, %vm1658
      %vm1691 = vmand %vm1675, %vm1659
      %vm1692 = vmand %vm1676, %vm1660
      %vm1693 = vmand %vm1677, %vm1661
      %vm1694 = vmand %vm1678, %vm1662
      %vm1695 = vmand %vm1679, %vm1663
      %vm1696 = vmand %vm1680, %vm1664
      %vm1697 = vmand %vm1681, %vm1665
      %v1698 = vadd.s32 %v1544, 16
      %v1699 = vadd.s32 %v1551, 16
      %v1700 = vadd.s32 %v1558, 16
      %v1701 = vadd.s32 %v1565, 16
      %v1702 = vadd.s32 %v1572, 16
      %v1703 = vadd.s32 %v1579, 16
      %v1704 = vadd.s32 %v1586, 16
      %v1705 = vadd.s32 %v1593, 16
      %v1706 = vadd.s32 %v1600, 16
      %v1707 = vadd.s32 %v1607, 16
      %v1708 = vadd.s32 %v1614, 16
      %v1709 = vadd.s32 %v1621, 16
      %v1710 = vadd.s32 %v1628, 16
      %v1711 = vadd.s32 %v1635, 16
      %v1712 = vadd.s32 %v1642, 16
      %v1713 = vadd.s32 %v1649, 16
      %v1714 = vsel %vm1682, %v1698, %v1544
      %v1715 = vsel %vm1683, %v1699, %v1551
      %v1716 = vsel %vm1684, %v1700, %v1558
      %v1717 = vsel %vm1685, %v1701, %v1565
      %v1718 = vsel %vm1686, %v1702, %v1572
      %v1719 = vsel %vm1687, %v1703, %v1579
      %v1720 = vsel %vm1688, %v1704, %v1586
      %v1721 = vsel %vm1689, %v1705, %v1593
      %v1722 = vsel %vm1690, %v1706, %v1600
      %v1723 = vsel %vm1691, %v1707, %v1607
      %v1724 = vsel %vm1692, %v1708, %v1614
      %v1725 = vsel %vm1693, %v1709, %v1621
      %v1726 = vsel %vm1694, %v1710, %v1628
      %v1727 = vsel %vm1695, %v1711, %v1635
      %v1728 = vsel %vm1696, %v1712, %v1642
      %v1729 = vsel %vm1697, %v1713, %v1649
      %vm1730 = vcmp.gt.s32.totalorder %v1714, 0
      %vm1731 = vcmp.gt.s32.totalorder %v1715, 0
      %vm1732 = vcmp.gt.s32.totalorder %v1716, 0
      %vm1733 = vcmp.gt.s32.totalorder %v1717, 0
      %vm1734 = vcmp.gt.s32.totalorder %v1718, 0
      %vm1735 = vcmp.gt.s32.totalorder %v1719, 0
      %vm1736 = vcmp.gt.s32.totalorder %v1720, 0
      %vm1737 = vcmp.gt.s32.totalorder %v1721, 0
      %vm1738 = vcmp.gt.s32.totalorder %v1722, 0
      %vm1739 = vcmp.gt.s32.totalorder %v1723, 0
      %vm1740 = vcmp.gt.s32.totalorder %v1724, 0
      %vm1741 = vcmp.gt.s32.totalorder %v1725, 0
      %vm1742 = vcmp.gt.s32.totalorder %v1726, 0
      %vm1743 = vcmp.gt.s32.totalorder %v1727, 0
      %vm1744 = vcmp.gt.s32.totalorder %v1728, 0
      %vm1745 = vcmp.gt.s32.totalorder %v1729, 0
      %v1746 = vrot.slane %v1339, 7
      %v1747 = vrot.slane %v1340, 7
      %v1748 = vrot.slane %v1341, 7
      %v1749 = vrot.slane %v1342, 7
      %v1750 = vrot.slane %v1343, 7
      %v1751 = vrot.slane %v1344, 7
      %v1752 = vrot.slane %v1345, 7
      %v1753 = vrot.slane %v1346, 7
      %v1754 = vrot.slane %v1347, 7
      %v1755 = vrot.slane %v1348, 7
      %v1756 = vrot.slane %v1349, 7
      %v1757 = vrot.slane %v1350, 7
      %v1758 = vrot.slane %v1351, 7
      %v1759 = vrot.slane %v1352, 7
      %v1760 = vrot.slane %v1353, 7
      %v1761 = vrot.slane %v1354, 7
      %vm1762 = vcmp.lt.s32.totalorder %v1522, 1
      %v1763 = vsel %vm1762, %v1760, %v1761
      %v1764 = vsel %vm1762, %v1759, %v1760
      %v1765 = vsel %vm1762, %v1758, %v1759
      %v1766 = vsel %vm1762, %v1757, %v1758
      %v1767 = vsel %vm1762, %v1756, %v1757
      %v1768 = vsel %vm1762, %v1755, %v1756
      %v1769 = vsel %vm1762, %v1754, %v1755
      %v1770 = vsel %vm1762, %v1753, %v1754
      %v1771 = vsel %vm1762, %v1752, %v1753
      %v1772 = vsel %vm1762, %v1751, %v1752
      %v1773 = vsel %vm1762, %v1750, %v1751
      %v1774 = vsel %vm1762, %v1749, %v1750
      %v1775 = vsel %vm1762, %v1748, %v1749
      %v1776 = vsel %vm1762, %v1747, %v1748
      %v1777 = vsel %vm1762, %v1746, %v1747
      %v1778 = vsel %vm1762, %v1761, %v1746
      %v1779 = vsel %vm1730, 1, 0
      %v1780 = vsel %vm1731, 1, 0
      %v1781 = vsel %vm1732, 1, 0
      %v1782 = vsel %vm1733, 1, 0
      %v1783 = vsel %vm1734, 1, 0
      %v1784 = vsel %vm1735, 1, 0
      %v1785 = vsel %vm1736, 1, 0
      %v1786 = vsel %vm1737, 1, 0
      %v1787 = vsel %vm1738, 1, 0
      %v1788 = vsel %vm1739, 1, 0
      %v1789 = vsel %vm1740, 1, 0
      %v1790 = vsel %vm1741, 1, 0
      %v1791 = vsel %vm1742, 1, 0
      %v1792 = vsel %vm1743, 1, 0
      %v1793 = vsel %vm1744, 1, 0
      %v1794 = vsel %vm1745, 1, 0
      %vm1795 = vcmp.eq.s32.totalorder %v1779, 1
      %vm1796 = vcmp.eq.s32.totalorder %v1780, 1
      %vm1797 = vcmp.eq.s32.totalorder %v1781, 1
      %vm1798 = vcmp.eq.s32.totalorder %v1782, 1
      %vm1799 = vcmp.eq.s32.totalorder %v1783, 1
      %vm1800 = vcmp.eq.s32.totalorder %v1784, 1
      %vm1801 = vcmp.eq.s32.totalorder %v1785, 1
      %vm1802 = vcmp.eq.s32.totalorder %v1786, 1
      %vm1803 = vcmp.eq.s32.totalorder %v1787, 1
      %vm1804 = vcmp.eq.s32.totalorder %v1788, 1
      %vm1805 = vcmp.eq.s32.totalorder %v1789, 1
      %vm1806 = vcmp.eq.s32.totalorder %v1790, 1
      %vm1807 = vcmp.eq.s32.totalorder %v1791, 1
      %vm1808 = vcmp.eq.s32.totalorder %v1792, 1
      %vm1809 = vcmp.eq.s32.totalorder %v1793, 1
      %vm1810 = vcmp.eq.s32.totalorder %v1794, 1
      %v1811 = vsel %vm1795, %v1778, 0.0
      %v1812 = vsel %vm1796, %v1777, 0.0
      %v1813 = vsel %vm1797, %v1776, 0.0
      %v1814 = vsel %vm1798, %v1775, 0.0
      %v1815 = vsel %vm1799, %v1774, 0.0
      %v1816 = vsel %vm1800, %v1773, 0.0
      %v1817 = vsel %vm1801, %v1772, 0.0
      %v1818 = vsel %vm1802, %v1771, 0.0
      %v1819 = vsel %vm1803, %v1770, 0.0
      %v1820 = vsel %vm1804, %v1769, 0.0
      %v1821 = vsel %vm1805, %v1768, 0.0
      %v1822 = vsel %vm1806, %v1767, 0.0
      %v1823 = vsel %vm1807, %v1766, 0.0
      %v1824 = vsel %vm1808, %v1765, 0.0
      %v1825 = vsel %vm1809, %v1764, 0.0
      %v1826 = vsel %vm1810, %v1763, 0.0
      %v1827 = vadd.f32 %v1422, %v1811
      %v1828 = vadd.f32 %v1423, %v1812
      %v1829 = vadd.f32 %v1424, %v1813
      %v1830 = vadd.f32 %v1425, %v1814
      %v1831 = vadd.f32 %v1426, %v1815
      %v1832 = vadd.f32 %v1427, %v1816
      %v1833 = vadd.f32 %v1428, %v1817
      %v1834 = vadd.f32 %v1429, %v1818
      %v1835 = vadd.f32 %v1430, %v1819
      %v1836 = vadd.f32 %v1431, %v1820
      %v1837 = vadd.f32 %v1432, %v1821
      %v1838 = vadd.f32 %v1433, %v1822
      %v1839 = vadd.f32 %v1434, %v1823
      %v1840 = vadd.f32 %v1435, %v1824
      %v1841 = vadd.f32 %v1436, %v1825
      %v1842 = vadd.f32 %v1437, %v1826
      %vm1843 = vcmp.lt.s32.totalorder %v1714, 15
      %vm1844 = vcmp.lt.s32.totalorder %v1715, 15
      %vm1845 = vcmp.lt.s32.totalorder %v1716, 15
      %vm1846 = vcmp.lt.s32.totalorder %v1717, 15
      %vm1847 = vcmp.lt.s32.totalorder %v1718, 15
      %vm1848 = vcmp.lt.s32.totalorder %v1719, 15
      %vm1849 = vcmp.lt.s32.totalorder %v1720, 15
      %vm1850 = vcmp.lt.s32.totalorder %v1721, 15
      %vm1851 = vcmp.lt.s32.totalorder %v1722, 15
      %vm1852 = vcmp.lt.s32.totalorder %v1723, 15
      %vm1853 = vcmp.lt.s32.totalorder %v1724, 15
      %vm1854 = vcmp.lt.s32.totalorder %v1725, 15
      %vm1855 = vcmp.lt.s32.totalorder %v1726, 15
      %vm1856 = vcmp.lt.s32.totalorder %v1727, 15
      %vm1857 = vcmp.lt.s32.totalorder %v1728, 15
      %vm1858 = vcmp.lt.s32.totalorder %v1729, 15
      %v1859 = vrot.slane %v1505, 1
      %v1860 = vrot.slane %v1506, 1
      %v1861 = vrot.slane %v1507, 1
      %v1862 = vrot.slane %v1508, 1
      %v1863 = vrot.slane %v1509, 1
      %v1864 = vrot.slane %v1510, 1
      %v1865 = vrot.slane %v1511, 1
      %v1866 = vrot.slane %v1512, 1
      %v1867 = vrot.slane %v1513, 1
      %v1868 = vrot.slane %v1514, 1
      %v1869 = vrot.slane %v1515, 1
      %v1870 = vrot.slane %v1516, 1
      %v1871 = vrot.slane %v1517, 1
      %v1872 = vrot.slane %v1518, 1
      %v1873 = vrot.slane %v1519, 1
      %v1874 = vrot.slane %v1520, 1
      %vm1875 = vcmp.lt.s32.totalorder %v1522, 7
      %v1876 = vsel %vm1875, %v1873, %v1874
      %v1877 = vsel %vm1875, %v1872, %v1873
      %v1878 = vsel %vm1875, %v1871, %v1872
      %v1879 = vsel %vm1875, %v1870, %v1871
      %v1880 = vsel %vm1875, %v1869, %v1870
      %v1881 = vsel %vm1875, %v1868, %v1869
      %v1882 = vsel %vm1875, %v1867, %v1868
      %v1883 = vsel %vm1875, %v1866, %v1867
      %v1884 = vsel %vm1875, %v1865, %v1866
      %v1885 = vsel %vm1875, %v1864, %v1865
      %v1886 = vsel %vm1875, %v1863, %v1864
      %v1887 = vsel %vm1875, %v1862, %v1863
      %v1888 = vsel %vm1875, %v1861, %v1862
      %v1889 = vsel %vm1875, %v1860, %v1861
      %v1890 = vsel %vm1875, %v1859, %v1860
      %v1891 = vsel %vm1875, %v1874, %v1859
      %v1892 = vsel %vm1843, 1, 0
      %v1893 = vsel %vm1844, 1, 0
      %v1894 = vsel %vm1845, 1, 0
      %v1895 = vsel %vm1846, 1, 0
      %v1896 = vsel %vm1847, 1, 0
      %v1897 = vsel %vm1848, 1, 0
      %v1898 = vsel %vm1849, 1, 0
      %v1899 = vsel %vm1850, 1, 0
      %v1900 = vsel %vm1851, 1, 0
      %v1901 = vsel %vm1852, 1, 0
      %v1902 = vsel %vm1853, 1, 0
      %v1903 = vsel %vm1854, 1, 0
      %v1904 = vsel %vm1855, 1, 0
      %v1905 = vsel %vm1856, 1, 0
      %v1906 = vsel %vm1857, 1, 0
      %v1907 = vsel %vm1858, 1, 0
      %vm1908 = vcmp.eq.s32.totalorder %v1892, 1
      %vm1909 = vcmp.eq.s32.totalorder %v1893, 1
      %vm1910 = vcmp.eq.s32.totalorder %v1894, 1
      %vm1911 = vcmp.eq.s32.totalorder %v1895, 1
      %vm1912 = vcmp.eq.s32.totalorder %v1896, 1
      %vm1913 = vcmp.eq.s32.totalorder %v1897, 1
      %vm1914 = vcmp.eq.s32.totalorder %v1898, 1
      %vm1915 = vcmp.eq.s32.totalorder %v1899, 1
      %vm1916 = vcmp.eq.s32.totalorder %v1900, 1
      %vm1917 = vcmp.eq.s32.totalorder %v1901, 1
      %vm1918 = vcmp.eq.s32.totalorder %v1902, 1
      %vm1919 = vcmp.eq.s32.totalorder %v1903, 1
      %vm1920 = vcmp.eq.s32.totalorder %v1904, 1
      %vm1921 = vcmp.eq.s32.totalorder %v1905, 1
      %vm1922 = vcmp.eq.s32.totalorder %v1906, 1
      %vm1923 = vcmp.eq.s32.totalorder %v1907, 1
      %v1924 = vsel %vm1908, %v1890, 0.0
      %v1925 = vsel %vm1909, %v1889, 0.0
      %v1926 = vsel %vm1910, %v1888, 0.0
      %v1927 = vsel %vm1911, %v1887, 0.0
      %v1928 = vsel %vm1912, %v1886, 0.0
      %v1929 = vsel %vm1913, %v1885, 0.0
      %v1930 = vsel %vm1914, %v1884, 0.0
      %v1931 = vsel %vm1915, %v1883, 0.0
      %v1932 = vsel %vm1916, %v1882, 0.0
      %v1933 = vsel %vm1917, %v1881, 0.0
      %v1934 = vsel %vm1918, %v1880, 0.0
      %v1935 = vsel %vm1919, %v1879, 0.0
      %v1936 = vsel %vm1920, %v1878, 0.0
      %v1937 = vsel %vm1921, %v1877, 0.0
      %v1938 = vsel %vm1922, %v1876, 0.0
      %v1939 = vsel %vm1923, %v1891, 0.0
      %v1940 = vadd.f32 %v1827, %v1924
      %v1941 = vadd.f32 %v1828, %v1925
      %v1942 = vadd.f32 %v1829, %v1926
      %v1943 = vadd.f32 %v1830, %v1927
      %v1944 = vadd.f32 %v1831, %v1928
      %v1945 = vadd.f32 %v1832, %v1929
      %v1946 = vadd.f32 %v1833, %v1930
      %v1947 = vadd.f32 %v1834, %v1931
      %v1948 = vadd.f32 %v1835, %v1932
      %v1949 = vadd.f32 %v1836, %v1933
      %v1950 = vadd.f32 %v1837, %v1934
      %v1951 = vadd.f32 %v1838, %v1935
      %v1952 = vadd.f32 %v1839, %v1936
      %v1953 = vadd.f32 %v1840, %v1937
      %v1954 = vadd.f32 %v1841, %v1938
      %v1955 = vadd.f32 %v1842, %v1939
      %v1956 = vmul.f32 %v1940, 0.5
      %v1957 = vmul.f32 %v1941, 0.5
      %v1958 = vmul.f32 %v1942, 0.5
      %v1959 = vmul.f32 %v1943, 0.5
      %v1960 = vmul.f32 %v1944, 0.5
      %v1961 = vmul.f32 %v1945, 0.5
      %v1962 = vmul.f32 %v1946, 0.5
      %v1963 = vmul.f32 %v1947, 0.5
      %v1964 = vmul.f32 %v1948, 0.5
      %v1965 = vmul.f32 %v1949, 0.5
      %v1966 = vmul.f32 %v1950, 0.5
      %v1967 = vmul.f32 %v1951, 0.5
      %v1968 = vmul.f32 %v1952, 0.5
      %v1969 = vmul.f32 %v1953, 0.5
      %v1970 = vmul.f32 %v1954, 0.5
      %v1971 = vmul.f32 %v1955, 0.5
      %v1972 = vmul.f32 %v1940, 0.70710677
      %v1973 = vmul.f32 %v1941, 0.70710677
      %v1974 = vmul.f32 %v1942, 0.70710677
      %v1975 = vmul.f32 %v1943, 0.70710677
      %v1976 = vmul.f32 %v1944, 0.70710677
      %v1977 = vmul.f32 %v1945, 0.70710677
      %v1978 = vmul.f32 %v1946, 0.70710677
      %v1979 = vmul.f32 %v1947, 0.70710677
      %v1980 = vmul.f32 %v1948, 0.70710677
      %v1981 = vmul.f32 %v1949, 0.70710677
      %v1982 = vmul.f32 %v1950, 0.70710677
      %v1983 = vmul.f32 %v1951, 0.70710677
      %v1984 = vmul.f32 %v1952, 0.70710677
      %v1985 = vmul.f32 %v1953, 0.70710677
      %v1986 = vmul.f32 %v1954, 0.70710677
      %v1987 = vmul.f32 %v1955, 0.70710677
      %v1988 = vmul.f32 %v1972, %v1972
      %v1989 = vmin.f32 16.0, %v1988
      %v1990 = vmul.f32 %v1989, 2.1237322e-06
      %v1991 = vadd.f32 %v1990, 0.00028619796
      %v1992 = vmul.f32 %v1989, %v1991
      %v1993 = vadd.f32 %v1992, 0.0036580483
      %v1994 = vmul.f32 %v1989, %v1993
      %v1995 = vadd.f32 %v1994, 0.05243302
      %v1996 = vmul.f32 %v1989, %v1995
      %v1997 = vadd.f32 %v1996, 0.18741608
      %v1998 = vmul.f32 %v1989, %v1997
      %v1999 = vadd.f32 %v1998, 1.1283791
      %v2000 = vmul.f32 %v1972, %v1999
      %v2001 = vmul.f32 %v1989, 3.8918573e-05
      %v2002 = vadd.f32 %v2001, 0.001143296
      %v2003 = vmul.f32 %v1989, %v2002
      %v2004 = vadd.f32 %v2003, 0.014752088
      %v2005 = vmul.f32 %v1989, %v2004
      %v2006 = vadd.f32 %v2005, 0.112945676
      %v2007 = vmul.f32 %v1989, %v2006
      %v2008 = vadd.f32 %v2007, 0.4994258
      %v2009 = vmul.f32 %v1989, %v2008
      %v2010 = vadd.f32 %v2009, 1.0
      %v2011 = vrcp.pop %v2010
      %v2012 = vmul.f32 %v2010, %v2011
      %v2013 = vsub.f32 1.0, %v2012
      %v2014 = vmul.f32 %v2011, %v2013
      %v2015 = vadd.f32 %v2011, %v2014
      %vm2016 = vweird.f32 %v2010
      %vm2017 = vweird.f32 %v2011
      %vm2018 = vmor %vm2016, %vm2017
      %v2019 = vsel %vm2018, %v2011, %v2015
      %v2020 = vand.u32 2147483647, %v2010
      %vm2021 = vcmp.eq.f32.partialorder %v2020, 8.507059e+37
      %v2022 = vand.u32 %v2010, 2147483648
      %v2023 = vor.u32 1.1754944e-38, %v2022
      %v2024 = vsel %vm2021, %v2023, %v2019
      %v2025 = vmul.f32 %v2000, %v2024
      %v2026 = vmin.f32 %v2025, 1.0
      %v2027 = vmax.f32 %v2026, -1.0
      %v2028 = vmul.f32 %v1973, %v1973
      %v2029 = vmin.f32 16.0, %v2028
      %v2030 = vmul.f32 %v2029, 2.1237322e-06
      %v2031 = vadd.f32 %v2030, 0.00028619796
      %v2032 = vmul.f32 %v2029, %v2031
      %v2033 = vadd.f32 %v2032, 0.0036580483
      %v2034 = vmul.f32 %v2029, %v2033
      %v2035 = vadd.f32 %v2034, 0.05243302
      %v2036 = vmul.f32 %v2029, %v2035
      %v2037 = vadd.f32 %v2036, 0.18741608
      %v2038 = vmul.f32 %v2029, %v2037
      %v2039 = vadd.f32 %v2038, 1.1283791
      %v2040 = vmul.f32 %v1973, %v2039
      %v2041 = vmul.f32 %v2029, 3.8918573e-05
      %v2042 = vadd.f32 %v2041, 0.001143296
      %v2043 = vmul.f32 %v2029, %v2042
      %v2044 = vadd.f32 %v2043, 0.014752088
      %v2045 = vmul.f32 %v2029, %v2044
      %v2046 = vadd.f32 %v2045, 0.112945676
      %v2047 = vmul.f32 %v2029, %v2046
      %v2048 = vadd.f32 %v2047, 0.4994258
      %v2049 = vmul.f32 %v2029, %v2048
      %v2050 = vadd.f32 %v2049, 1.0
      %v2051 = vrcp.pop %v2050
      %v2052 = vmul.f32 %v2050, %v2051
      %v2053 = vsub.f32 1.0, %v2052
      %v2054 = vmul.f32 %v2051, %v2053
      %v2055 = vadd.f32 %v2051, %v2054
      %vm2056 = vweird.f32 %v2050
      %vm2057 = vweird.f32 %v2051
      %vm2058 = vmor %vm2056, %vm2057
      %v2059 = vsel %vm2058, %v2051, %v2055
      %v2060 = vand.u32 2147483647, %v2050
      %vm2061 = vcmp.eq.f32.partialorder %v2060, 8.507059e+37
      %v2062 = vand.u32 %v2050, 2147483648
      %v2063 = vor.u32 1.1754944e-38, %v2062
      %v2064 = vsel %vm2061, %v2063, %v2059
      %v2065 = vmul.f32 %v2040, %v2064
      %v2066 = vmin.f32 %v2065, 1.0
      %v2067 = vmax.f32 %v2066, -1.0
      %v2068 = vmul.f32 %v1974, %v1974
      %v2069 = vmin.f32 16.0, %v2068
      %v2070 = vmul.f32 %v2069, 2.1237322e-06
      %v2071 = vadd.f32 %v2070, 0.00028619796
      %v2072 = vmul.f32 %v2069, %v2071
      %v2073 = vadd.f32 %v2072, 0.0036580483
      %v2074 = vmul.f32 %v2069, %v2073
      %v2075 = vadd.f32 %v2074, 0.05243302
      %v2076 = vmul.f32 %v2069, %v2075
      %v2077 = vadd.f32 %v2076, 0.18741608
      %v2078 = vmul.f32 %v2069, %v2077
      %v2079 = vadd.f32 %v2078, 1.1283791
      %v2080 = vmul.f32 %v1974, %v2079
      %v2081 = vmul.f32 %v2069, 3.8918573e-05
      %v2082 = vadd.f32 %v2081, 0.001143296
      %v2083 = vmul.f32 %v2069, %v2082
      %v2084 = vadd.f32 %v2083, 0.014752088
      %v2085 = vmul.f32 %v2069, %v2084
      %v2086 = vadd.f32 %v2085, 0.112945676
      %v2087 = vmul.f32 %v2069, %v2086
      %v2088 = vadd.f32 %v2087, 0.4994258
      %v2089 = vmul.f32 %v2069, %v2088
      %v2090 = vadd.f32 %v2089, 1.0
      %v2091 = vrcp.pop %v2090
      %v2092 = vmul.f32 %v2090, %v2091
      %v2093 = vsub.f32 1.0, %v2092
      %v2094 = vmul.f32 %v2091, %v2093
      %v2095 = vadd.f32 %v2091, %v2094
      %vm2096 = vweird.f32 %v2090
      %vm2097 = vweird.f32 %v2091
      %vm2098 = vmor %vm2096, %vm2097
      %v2099 = vsel %vm2098, %v2091, %v2095
      %v2100 = vand.u32 2147483647, %v2090
      %vm2101 = vcmp.eq.f32.partialorder %v2100, 8.507059e+37
      %v2102 = vand.u32 %v2090, 2147483648
      %v2103 = vor.u32 1.1754944e-38, %v2102
      %v2104 = vsel %vm2101, %v2103, %v2099
      %v2105 = vmul.f32 %v2080, %v2104
      %v2106 = vmin.f32 %v2105, 1.0
      %v2107 = vmax.f32 %v2106, -1.0
      %v2108 = vmul.f32 %v1975, %v1975
      %v2109 = vmin.f32 16.0, %v2108
      %v2110 = vmul.f32 %v2109, 2.1237322e-06
      %v2111 = vadd.f32 %v2110, 0.00028619796
      %v2112 = vmul.f32 %v2109, %v2111
      %v2113 = vadd.f32 %v2112, 0.0036580483
      %v2114 = vmul.f32 %v2109, %v2113
      %v2115 = vadd.f32 %v2114, 0.05243302
      %v2116 = vmul.f32 %v2109, %v2115
      %v2117 = vadd.f32 %v2116, 0.18741608
      %v2118 = vmul.f32 %v2109, %v2117
      %v2119 = vadd.f32 %v2118, 1.1283791
      %v2120 = vmul.f32 %v1975, %v2119
      %v2121 = vmul.f32 %v2109, 3.8918573e-05
      %v2122 = vadd.f32 %v2121, 0.001143296
      %v2123 = vmul.f32 %v2109, %v2122
      %v2124 = vadd.f32 %v2123, 0.014752088
      %v2125 = vmul.f32 %v2109, %v2124
      %v2126 = vadd.f32 %v2125, 0.112945676
      %v2127 = vmul.f32 %v2109, %v2126
      %v2128 = vadd.f32 %v2127, 0.4994258
      %v2129 = vmul.f32 %v2109, %v2128
      %v2130 = vadd.f32 %v2129, 1.0
      %v2131 = vrcp.pop %v2130
      %v2132 = vmul.f32 %v2130, %v2131
      %v2133 = vsub.f32 1.0, %v2132
      %v2134 = vmul.f32 %v2131, %v2133
      %v2135 = vadd.f32 %v2131, %v2134
      %vm2136 = vweird.f32 %v2130
      %vm2137 = vweird.f32 %v2131
      %vm2138 = vmor %vm2136, %vm2137
      %v2139 = vsel %vm2138, %v2131, %v2135
      %v2140 = vand.u32 2147483647, %v2130
      %vm2141 = vcmp.eq.f32.partialorder %v2140, 8.507059e+37
      %v2142 = vand.u32 %v2130, 2147483648
      %v2143 = vor.u32 1.1754944e-38, %v2142
      %v2144 = vsel %vm2141, %v2143, %v2139
      %v2145 = vmul.f32 %v2120, %v2144
      %v2146 = vmin.f32 %v2145, 1.0
      %v2147 = vmax.f32 %v2146, -1.0
      %v2148 = vmul.f32 %v1976, %v1976
      %v2149 = vmin.f32 16.0, %v2148
      %v2150 = vmul.f32 %v2149, 2.1237322e-06
      %v2151 = vadd.f32 %v2150, 0.00028619796
      %v2152 = vmul.f32 %v2149, %v2151
      %v2153 = vadd.f32 %v2152, 0.0036580483
      %v2154 = vmul.f32 %v2149, %v2153
      %v2155 = vadd.f32 %v2154, 0.05243302
      %v2156 = vmul.f32 %v2149, %v2155
      %v2157 = vadd.f32 %v2156, 0.18741608
      %v2158 = vmul.f32 %v2149, %v2157
      %v2159 = vadd.f32 %v2158, 1.1283791
      %v2160 = vmul.f32 %v1976, %v2159
      %v2161 = vmul.f32 %v2149, 3.8918573e-05
      %v2162 = vadd.f32 %v2161, 0.001143296
      %v2163 = vmul.f32 %v2149, %v2162
      %v2164 = vadd.f32 %v2163, 0.014752088
      %v2165 = vmul.f32 %v2149, %v2164
      %v2166 = vadd.f32 %v2165, 0.112945676
      %v2167 = vmul.f32 %v2149, %v2166
      %v2168 = vadd.f32 %v2167, 0.4994258
      %v2169 = vmul.f32 %v2149, %v2168
      %v2170 = vadd.f32 %v2169, 1.0
      %v2171 = vrcp.pop %v2170
      %v2172 = vmul.f32 %v2170, %v2171
      %v2173 = vsub.f32 1.0, %v2172
      %v2174 = vmul.f32 %v2171, %v2173
      %v2175 = vadd.f32 %v2171, %v2174
      %vm2176 = vweird.f32 %v2170
      %vm2177 = vweird.f32 %v2171
      %vm2178 = vmor %vm2176, %vm2177
      %v2179 = vsel %vm2178, %v2171, %v2175
      %v2180 = vand.u32 2147483647, %v2170
      %vm2181 = vcmp.eq.f32.partialorder %v2180, 8.507059e+37
      %v2182 = vand.u32 %v2170, 2147483648
      %v2183 = vor.u32 1.1754944e-38, %v2182
      %v2184 = vsel %vm2181, %v2183, %v2179
      %v2185 = vmul.f32 %v2160, %v2184
      %v2186 = vmin.f32 %v2185, 1.0
      %v2187 = vmax.f32 %v2186, -1.0
      %v2188 = vmul.f32 %v1977, %v1977
      %v2189 = vmin.f32 16.0, %v2188
      %v2190 = vmul.f32 %v2189, 2.1237322e-06
      %v2191 = vadd.f32 %v2190, 0.00028619796
      %v2192 = vmul.f32 %v2189, %v2191
      %v2193 = vadd.f32 %v2192, 0.0036580483
      %v2194 = vmul.f32 %v2189, %v2193
      %v2195 = vadd.f32 %v2194, 0.05243302
      %v2196 = vmul.f32 %v2189, %v2195
      %v2197 = vadd.f32 %v2196, 0.18741608
      %v2198 = vmul.f32 %v2189, %v2197
      %v2199 = vadd.f32 %v2198, 1.1283791
      %v2200 = vmul.f32 %v1977, %v2199
      %v2201 = vmul.f32 %v2189, 3.8918573e-05
      %v2202 = vadd.f32 %v2201, 0.001143296
      %v2203 = vmul.f32 %v2189, %v2202
      %v2204 = vadd.f32 %v2203, 0.014752088
      %v2205 = vmul.f32 %v2189, %v2204
      %v2206 = vadd.f32 %v2205, 0.112945676
      %v2207 = vmul.f32 %v2189, %v2206
      %v2208 = vadd.f32 %v2207, 0.4994258
      %v2209 = vmul.f32 %v2189, %v2208
      %v2210 = vadd.f32 %v2209, 1.0
      %v2211 = vrcp.pop %v2210
      %v2212 = vmul.f32 %v2210, %v2211
      %v2213 = vsub.f32 1.0, %v2212
      %v2214 = vmul.f32 %v2211, %v2213
      %v2215 = vadd.f32 %v2211, %v2214
      %vm2216 = vweird.f32 %v2210
      %vm2217 = vweird.f32 %v2211
      %vm2218 = vmor %vm2216, %vm2217
      %v2219 = vsel %vm2218, %v2211, %v2215
      %v2220 = vand.u32 2147483647, %v2210
      %vm2221 = vcmp.eq.f32.partialorder %v2220, 8.507059e+37
      %v2222 = vand.u32 %v2210, 2147483648
      %v2223 = vor.u32 1.1754944e-38, %v2222
      %v2224 = vsel %vm2221, %v2223, %v2219
      %v2225 = vmul.f32 %v2200, %v2224
      %v2226 = vmin.f32 %v2225, 1.0
      %v2227 = vmax.f32 %v2226, -1.0
      %v2228 = vmul.f32 %v1978, %v1978
      %v2229 = vmin.f32 16.0, %v2228
      %v2230 = vmul.f32 %v2229, 2.1237322e-06
      %v2231 = vadd.f32 %v2230, 0.00028619796
      %v2232 = vmul.f32 %v2229, %v2231
      %v2233 = vadd.f32 %v2232, 0.0036580483
      %v2234 = vmul.f32 %v2229, %v2233
      %v2235 = vadd.f32 %v2234, 0.05243302
      %v2236 = vmul.f32 %v2229, %v2235
      %v2237 = vadd.f32 %v2236, 0.18741608
      %v2238 = vmul.f32 %v2229, %v2237
      %v2239 = vadd.f32 %v2238, 1.1283791
      %v2240 = vmul.f32 %v1978, %v2239
      %v2241 = vmul.f32 %v2229, 3.8918573e-05
      %v2242 = vadd.f32 %v2241, 0.001143296
      %v2243 = vmul.f32 %v2229, %v2242
      %v2244 = vadd.f32 %v2243, 0.014752088
      %v2245 = vmul.f32 %v2229, %v2244
      %v2246 = vadd.f32 %v2245, 0.112945676
      %v2247 = vmul.f32 %v2229, %v2246
      %v2248 = vadd.f32 %v2247, 0.4994258
      %v2249 = vmul.f32 %v2229, %v2248
      %v2250 = vadd.f32 %v2249, 1.0
      %v2251 = vrcp.pop %v2250
      %v2252 = vmul.f32 %v2250, %v2251
      %v2253 = vsub.f32 1.0, %v2252
      %v2254 = vmul.f32 %v2251, %v2253
      %v2255 = vadd.f32 %v2251, %v2254
      %vm2256 = vweird.f32 %v2250
      %vm2257 = vweird.f32 %v2251
      %vm2258 = vmor %vm2256, %vm2257
      %v2259 = vsel %vm2258, %v2251, %v2255
      %v2260 = vand.u32 2147483647, %v2250
      %vm2261 = vcmp.eq.f32.partialorder %v2260, 8.507059e+37
      %v2262 = vand.u32 %v2250, 2147483648
      %v2263 = vor.u32 1.1754944e-38, %v2262
      %v2264 = vsel %vm2261, %v2263, %v2259
      %v2265 = vmul.f32 %v2240, %v2264
      %v2266 = vmin.f32 %v2265, 1.0
      %v2267 = vmax.f32 %v2266, -1.0
      %v2268 = vmul.f32 %v1979, %v1979
      %v2269 = vmin.f32 16.0, %v2268
      %v2270 = vmul.f32 %v2269, 2.1237322e-06
      %v2271 = vadd.f32 %v2270, 0.00028619796
      %v2272 = vmul.f32 %v2269, %v2271
      %v2273 = vadd.f32 %v2272, 0.0036580483
      %v2274 = vmul.f32 %v2269, %v2273
      %v2275 = vadd.f32 %v2274, 0.05243302
      %v2276 = vmul.f32 %v2269, %v2275
      %v2277 = vadd.f32 %v2276, 0.18741608
      %v2278 = vmul.f32 %v2269, %v2277
      %v2279 = vadd.f32 %v2278, 1.1283791
      %v2280 = vmul.f32 %v1979, %v2279
      %v2281 = vmul.f32 %v2269, 3.8918573e-05
      %v2282 = vadd.f32 %v2281, 0.001143296
      %v2283 = vmul.f32 %v2269, %v2282
      %v2284 = vadd.f32 %v2283, 0.014752088
      %v2285 = vmul.f32 %v2269, %v2284
      %v2286 = vadd.f32 %v2285, 0.112945676
      %v2287 = vmul.f32 %v2269, %v2286
      %v2288 = vadd.f32 %v2287, 0.4994258
      %v2289 = vmul.f32 %v2269, %v2288
      %v2290 = vadd.f32 %v2289, 1.0
      %v2291 = vrcp.pop %v2290
      %v2292 = vmul.f32 %v2290, %v2291
      %v2293 = vsub.f32 1.0, %v2292
      %v2294 = vmul.f32 %v2291, %v2293
      %v2295 = vadd.f32 %v2291, %v2294
      %vm2296 = vweird.f32 %v2290
      %vm2297 = vweird.f32 %v2291
      %vm2298 = vmor %vm2296, %vm2297
      %v2299 = vsel %vm2298, %v2291, %v2295
      %v2300 = vand.u32 2147483647, %v2290
      %vm2301 = vcmp.eq.f32.partialorder %v2300, 8.507059e+37
      %v2302 = vand.u32 %v2290, 2147483648
      %v2303 = vor.u32 1.1754944e-38, %v2302
      %v2304 = vsel %vm2301, %v2303, %v2299
      %v2305 = vmul.f32 %v2280, %v2304
      %v2306 = vmin.f32 %v2305, 1.0
      %v2307 = vmax.f32 %v2306, -1.0
      %v2308 = vmul.f32 %v1980, %v1980
      %v2309 = vmin.f32 16.0, %v2308
      %v2310 = vmul.f32 %v2309, 2.1237322e-06
      %v2311 = vadd.f32 %v2310, 0.00028619796
      %v2312 = vmul.f32 %v2309, %v2311
      %v2313 = vadd.f32 %v2312, 0.0036580483
      %v2314 = vmul.f32 %v2309, %v2313
      %v2315 = vadd.f32 %v2314, 0.05243302
      %v2316 = vmul.f32 %v2309, %v2315
      %v2317 = vadd.f32 %v2316, 0.18741608
      %v2318 = vmul.f32 %v2309, %v2317
      %v2319 = vadd.f32 %v2318, 1.1283791
      %v2320 = vmul.f32 %v1980, %v2319
      %v2321 = vmul.f32 %v2309, 3.8918573e-05
      %v2322 = vadd.f32 %v2321, 0.001143296
      %v2323 = vmul.f32 %v2309, %v2322
      %v2324 = vadd.f32 %v2323, 0.014752088
      %v2325 = vmul.f32 %v2309, %v2324
      %v2326 = vadd.f32 %v2325, 0.112945676
      %v2327 = vmul.f32 %v2309, %v2326
      %v2328 = vadd.f32 %v2327, 0.4994258
      %v2329 = vmul.f32 %v2309, %v2328
      %v2330 = vadd.f32 %v2329, 1.0
      %v2331 = vrcp.pop %v2330
      %v2332 = vmul.f32 %v2330, %v2331
      %v2333 = vsub.f32 1.0, %v2332
      %v2334 = vmul.f32 %v2331, %v2333
      %v2335 = vadd.f32 %v2331, %v2334
      %vm2336 = vweird.f32 %v2330
      %vm2337 = vweird.f32 %v2331
      %vm2338 = vmor %vm2336, %vm2337
      %v2339 = vsel %vm2338, %v2331, %v2335
      %v2340 = vand.u32 2147483647, %v2330
      %vm2341 = vcmp.eq.f32.partialorder %v2340, 8.507059e+37
      %v2342 = vand.u32 %v2330, 2147483648
      %v2343 = vor.u32 1.1754944e-38, %v2342
      %v2344 = vsel %vm2341, %v2343, %v2339
      %v2345 = vmul.f32 %v2320, %v2344
      %v2346 = vmin.f32 %v2345, 1.0
      %v2347 = vmax.f32 %v2346, -1.0
      %v2348 = vmul.f32 %v1981, %v1981
      %v2349 = vmin.f32 16.0, %v2348
      %v2350 = vmul.f32 %v2349, 2.1237322e-06
      %v2351 = vadd.f32 %v2350, 0.00028619796
      %v2352 = vmul.f32 %v2349, %v2351
      %v2353 = vadd.f32 %v2352, 0.0036580483
      %v2354 = vmul.f32 %v2349, %v2353
      %v2355 = vadd.f32 %v2354, 0.05243302
      %v2356 = vmul.f32 %v2349, %v2355
      %v2357 = vadd.f32 %v2356, 0.18741608
      %v2358 = vmul.f32 %v2349, %v2357
      %v2359 = vadd.f32 %v2358, 1.1283791
      %v2360 = vmul.f32 %v1981, %v2359
      %v2361 = vmul.f32 %v2349, 3.8918573e-05
      %v2362 = vadd.f32 %v2361, 0.001143296
      %v2363 = vmul.f32 %v2349, %v2362
      %v2364 = vadd.f32 %v2363, 0.014752088
      %v2365 = vmul.f32 %v2349, %v2364
      %v2366 = vadd.f32 %v2365, 0.112945676
      %v2367 = vmul.f32 %v2349, %v2366
      %v2368 = vadd.f32 %v2367, 0.4994258
      %v2369 = vmul.f32 %v2349, %v2368
      %v2370 = vadd.f32 %v2369, 1.0
      %v2371 = vrcp.pop %v2370
      %v2372 = vmul.f32 %v2370, %v2371
      %v2373 = vsub.f32 1.0, %v2372
      %v2374 = vmul.f32 %v2371, %v2373
      %v2375 = vadd.f32 %v2371, %v2374
      %vm2376 = vweird.f32 %v2370
      %vm2377 = vweird.f32 %v2371
      %vm2378 = vmor %vm2376, %vm2377
      %v2379 = vsel %vm2378, %v2371, %v2375
      %v2380 = vand.u32 2147483647, %v2370
      %vm2381 = vcmp.eq.f32.partialorder %v2380, 8.507059e+37
      %v2382 = vand.u32 %v2370, 2147483648
      %v2383 = vor.u32 1.1754944e-38, %v2382
      %v2384 = vsel %vm2381, %v2383, %v2379
      %v2385 = vmul.f32 %v2360, %v2384
      %v2386 = vmin.f32 %v2385, 1.0
      %v2387 = vmax.f32 %v2386, -1.0
      %v2388 = vmul.f32 %v1982, %v1982
      %v2389 = vmin.f32 16.0, %v2388
      %v2390 = vmul.f32 %v2389, 2.1237322e-06
      %v2391 = vadd.f32 %v2390, 0.00028619796
      %v2392 = vmul.f32 %v2389, %v2391
      %v2393 = vadd.f32 %v2392, 0.0036580483
      %v2394 = vmul.f32 %v2389, %v2393
      %v2395 = vadd.f32 %v2394, 0.05243302
      %v2396 = vmul.f32 %v2389, %v2395
      %v2397 = vadd.f32 %v2396, 0.18741608
      %v2398 = vmul.f32 %v2389, %v2397
      %v2399 = vadd.f32 %v2398, 1.1283791
      %v2400 = vmul.f32 %v1982, %v2399
      %v2401 = vmul.f32 %v2389, 3.8918573e-05
      %v2402 = vadd.f32 %v2401, 0.001143296
      %v2403 = vmul.f32 %v2389, %v2402
      %v2404 = vadd.f32 %v2403, 0.014752088
      %v2405 = vmul.f32 %v2389, %v2404
      %v2406 = vadd.f32 %v2405, 0.112945676
      %v2407 = vmul.f32 %v2389, %v2406
      %v2408 = vadd.f32 %v2407, 0.4994258
      %v2409 = vmul.f32 %v2389, %v2408
      %v2410 = vadd.f32 %v2409, 1.0
      %v2411 = vrcp.pop %v2410
      %v2412 = vmul.f32 %v2410, %v2411
      %v2413 = vsub.f32 1.0, %v2412
      %v2414 = vmul.f32 %v2411, %v2413
      %v2415 = vadd.f32 %v2411, %v2414
      %vm2416 = vweird.f32 %v2410
      %vm2417 = vweird.f32 %v2411
      %vm2418 = vmor %vm2416, %vm2417
      %v2419 = vsel %vm2418, %v2411, %v2415
      %v2420 = vand.u32 2147483647, %v2410
      %vm2421 = vcmp.eq.f32.partialorder %v2420, 8.507059e+37
      %v2422 = vand.u32 %v2410, 2147483648
      %v2423 = vor.u32 1.1754944e-38, %v2422
      %v2424 = vsel %vm2421, %v2423, %v2419
      %v2425 = vmul.f32 %v2400, %v2424
      %v2426 = vmin.f32 %v2425, 1.0
      %v2427 = vmax.f32 %v2426, -1.0
      %v2428 = vmul.f32 %v1983, %v1983
      %v2429 = vmin.f32 16.0, %v2428
      %v2430 = vmul.f32 %v2429, 2.1237322e-06
      %v2431 = vadd.f32 %v2430, 0.00028619796
      %v2432 = vmul.f32 %v2429, %v2431
      %v2433 = vadd.f32 %v2432, 0.0036580483
      %v2434 = vmul.f32 %v2429, %v2433
      %v2435 = vadd.f32 %v2434, 0.05243302
      %v2436 = vmul.f32 %v2429, %v2435
      %v2437 = vadd.f32 %v2436, 0.18741608
      %v2438 = vmul.f32 %v2429, %v2437
      %v2439 = vadd.f32 %v2438, 1.1283791
      %v2440 = vmul.f32 %v1983, %v2439
      %v2441 = vmul.f32 %v2429, 3.8918573e-05
      %v2442 = vadd.f32 %v2441, 0.001143296
      %v2443 = vmul.f32 %v2429, %v2442
      %v2444 = vadd.f32 %v2443, 0.014752088
      %v2445 = vmul.f32 %v2429, %v2444
      %v2446 = vadd.f32 %v2445, 0.112945676
      %v2447 = vmul.f32 %v2429, %v2446
      %v2448 = vadd.f32 %v2447, 0.4994258
      %v2449 = vmul.f32 %v2429, %v2448
      %v2450 = vadd.f32 %v2449, 1.0
      %v2451 = vrcp.pop %v2450
      %v2452 = vmul.f32 %v2450, %v2451
      %v2453 = vsub.f32 1.0, %v2452
      %v2454 = vmul.f32 %v2451, %v2453
      %v2455 = vadd.f32 %v2451, %v2454
      %vm2456 = vweird.f32 %v2450
      %vm2457 = vweird.f32 %v2451
      %vm2458 = vmor %vm2456, %vm2457
      %v2459 = vsel %vm2458, %v2451, %v2455
      %v2460 = vand.u32 2147483647, %v2450
      %vm2461 = vcmp.eq.f32.partialorder %v2460, 8.507059e+37
      %v2462 = vand.u32 %v2450, 2147483648
      %v2463 = vor.u32 1.1754944e-38, %v2462
      %v2464 = vsel %vm2461, %v2463, %v2459
      %v2465 = vmul.f32 %v2440, %v2464
      %v2466 = vmin.f32 %v2465, 1.0
      %v2467 = vmax.f32 %v2466, -1.0
      %v2468 = vmul.f32 %v1984, %v1984
      %v2469 = vmin.f32 16.0, %v2468
      %v2470 = vmul.f32 %v2469, 2.1237322e-06
      %v2471 = vadd.f32 %v2470, 0.00028619796
      %v2472 = vmul.f32 %v2469, %v2471
      %v2473 = vadd.f32 %v2472, 0.0036580483
      %v2474 = vmul.f32 %v2469, %v2473
      %v2475 = vadd.f32 %v2474, 0.05243302
      %v2476 = vmul.f32 %v2469, %v2475
      %v2477 = vadd.f32 %v2476, 0.18741608
      %v2478 = vmul.f32 %v2469, %v2477
      %v2479 = vadd.f32 %v2478, 1.1283791
      %v2480 = vmul.f32 %v1984, %v2479
      %v2481 = vmul.f32 %v2469, 3.8918573e-05
      %v2482 = vadd.f32 %v2481, 0.001143296
      %v2483 = vmul.f32 %v2469, %v2482
      %v2484 = vadd.f32 %v2483, 0.014752088
      %v2485 = vmul.f32 %v2469, %v2484
      %v2486 = vadd.f32 %v2485, 0.112945676
      %v2487 = vmul.f32 %v2469, %v2486
      %v2488 = vadd.f32 %v2487, 0.4994258
      %v2489 = vmul.f32 %v2469, %v2488
      %v2490 = vadd.f32 %v2489, 1.0
      %v2491 = vrcp.pop %v2490
      %v2492 = vmul.f32 %v2490, %v2491
      %v2493 = vsub.f32 1.0, %v2492
      %v2494 = vmul.f32 %v2491, %v2493
      %v2495 = vadd.f32 %v2491, %v2494
      %vm2496 = vweird.f32 %v2490
      %vm2497 = vweird.f32 %v2491
      %vm2498 = vmor %vm2496, %vm2497
      %v2499 = vsel %vm2498, %v2491, %v2495
      %v2500 = vand.u32 2147483647, %v2490
      %vm2501 = vcmp.eq.f32.partialorder %v2500, 8.507059e+37
      %v2502 = vand.u32 %v2490, 2147483648
      %v2503 = vor.u32 1.1754944e-38, %v2502
      %v2504 = vsel %vm2501, %v2503, %v2499
      %v2505 = vmul.f32 %v2480, %v2504
      %v2506 = vmin.f32 %v2505, 1.0
      %v2507 = vmax.f32 %v2506, -1.0
      %v2508 = vmul.f32 %v1985, %v1985
      %v2509 = vmin.f32 16.0, %v2508
      %v2510 = vmul.f32 %v2509, 2.1237322e-06
      %v2511 = vadd.f32 %v2510, 0.00028619796
      %v2512 = vmul.f32 %v2509, %v2511
      %v2513 = vadd.f32 %v2512, 0.0036580483
      %v2514 = vmul.f32 %v2509, %v2513
      %v2515 = vadd.f32 %v2514, 0.05243302
      %v2516 = vmul.f32 %v2509, %v2515
      %v2517 = vadd.f32 %v2516, 0.18741608
      %v2518 = vmul.f32 %v2509, %v2517
      %v2519 = vadd.f32 %v2518, 1.1283791
      %v2520 = vmul.f32 %v1985, %v2519
      %v2521 = vmul.f32 %v2509, 3.8918573e-05
      %v2522 = vadd.f32 %v2521, 0.001143296
      %v2523 = vmul.f32 %v2509, %v2522
      %v2524 = vadd.f32 %v2523, 0.014752088
      %v2525 = vmul.f32 %v2509, %v2524
      %v2526 = vadd.f32 %v2525, 0.112945676
      %v2527 = vmul.f32 %v2509, %v2526
      %v2528 = vadd.f32 %v2527, 0.4994258
      %v2529 = vmul.f32 %v2509, %v2528
      %v2530 = vadd.f32 %v2529, 1.0
      %v2531 = vrcp.pop %v2530
      %v2532 = vmul.f32 %v2530, %v2531
      %v2533 = vsub.f32 1.0, %v2532
      %v2534 = vmul.f32 %v2531, %v2533
      %v2535 = vadd.f32 %v2531, %v2534
      %vm2536 = vweird.f32 %v2530
      %vm2537 = vweird.f32 %v2531
      %vm2538 = vmor %vm2536, %vm2537
      %v2539 = vsel %vm2538, %v2531, %v2535
      %v2540 = vand.u32 2147483647, %v2530
      %vm2541 = vcmp.eq.f32.partialorder %v2540, 8.507059e+37
      %v2542 = vand.u32 %v2530, 2147483648
      %v2543 = vor.u32 1.1754944e-38, %v2542
      %v2544 = vsel %vm2541, %v2543, %v2539
      %v2545 = vmul.f32 %v2520, %v2544
      %v2546 = vmin.f32 %v2545, 1.0
      %v2547 = vmax.f32 %v2546, -1.0
      %v2548 = vmul.f32 %v1986, %v1986
      %v2549 = vmin.f32 16.0, %v2548
      %v2550 = vmul.f32 %v2549, 2.1237322e-06
      %v2551 = vadd.f32 %v2550, 0.00028619796
      %v2552 = vmul.f32 %v2549, %v2551
      %v2553 = vadd.f32 %v2552, 0.0036580483
      %v2554 = vmul.f32 %v2549, %v2553
      %v2555 = vadd.f32 %v2554, 0.05243302
      %v2556 = vmul.f32 %v2549, %v2555
      %v2557 = vadd.f32 %v2556, 0.18741608
      %v2558 = vmul.f32 %v2549, %v2557
      %v2559 = vadd.f32 %v2558, 1.1283791
      %v2560 = vmul.f32 %v1986, %v2559
      %v2561 = vmul.f32 %v2549, 3.8918573e-05
      %v2562 = vadd.f32 %v2561, 0.001143296
      %v2563 = vmul.f32 %v2549, %v2562
      %v2564 = vadd.f32 %v2563, 0.014752088
      %v2565 = vmul.f32 %v2549, %v2564
      %v2566 = vadd.f32 %v2565, 0.112945676
      %v2567 = vmul.f32 %v2549, %v2566
      %v2568 = vadd.f32 %v2567, 0.4994258
      %v2569 = vmul.f32 %v2549, %v2568
      %v2570 = vadd.f32 %v2569, 1.0
      %v2571 = vrcp.pop %v2570
      %v2572 = vmul.f32 %v2570, %v2571
      %v2573 = vsub.f32 1.0, %v2572
      %v2574 = vmul.f32 %v2571, %v2573
      %v2575 = vadd.f32 %v2571, %v2574
      %vm2576 = vweird.f32 %v2570
      %vm2577 = vweird.f32 %v2571
      %vm2578 = vmor %vm2576, %vm2577
      %v2579 = vsel %vm2578, %v2571, %v2575
      %v2580 = vand.u32 2147483647, %v2570
      %vm2581 = vcmp.eq.f32.partialorder %v2580, 8.507059e+37
      %v2582 = vand.u32 %v2570, 2147483648
      %v2583 = vor.u32 1.1754944e-38, %v2582
      %v2584 = vsel %vm2581, %v2583, %v2579
      %v2585 = vmul.f32 %v2560, %v2584
      %v2586 = vmin.f32 %v2585, 1.0
      %v2587 = vmax.f32 %v2586, -1.0
      %v2588 = vmul.f32 %v1987, %v1987
      %v2589 = vmin.f32 16.0, %v2588
      %v2590 = vmul.f32 %v2589, 2.1237322e-06
      %v2591 = vadd.f32 %v2590, 0.00028619796
      %v2592 = vmul.f32 %v2589, %v2591
      %v2593 = vadd.f32 %v2592, 0.0036580483
      %v2594 = vmul.f32 %v2589, %v2593
      %v2595 = vadd.f32 %v2594, 0.05243302
      %v2596 = vmul.f32 %v2589, %v2595
      %v2597 = vadd.f32 %v2596, 0.18741608
      %v2598 = vmul.f32 %v2589, %v2597
      %v2599 = vadd.f32 %v2598, 1.1283791
      %v2600 = vmul.f32 %v1987, %v2599
      %v2601 = vmul.f32 %v2589, 3.8918573e-05
      %v2602 = vadd.f32 %v2601, 0.001143296
      %v2603 = vmul.f32 %v2589, %v2602
      %v2604 = vadd.f32 %v2603, 0.014752088
      %v2605 = vmul.f32 %v2589, %v2604
      %v2606 = vadd.f32 %v2605, 0.112945676
      %v2607 = vmul.f32 %v2589, %v2606
      %v2608 = vadd.f32 %v2607, 0.4994258
      %v2609 = vmul.f32 %v2589, %v2608
      %v2610 = vadd.f32 %v2609, 1.0
      %v2611 = vrcp.pop %v2610
      %v2612 = vmul.f32 %v2610, %v2611
      %v2613 = vsub.f32 1.0, %v2612
      %v2614 = vmul.f32 %v2611, %v2613
      %v2615 = vadd.f32 %v2611, %v2614
      %vm2616 = vweird.f32 %v2610
      %vm2617 = vweird.f32 %v2611
      %vm2618 = vmor %vm2616, %vm2617
      %v2619 = vsel %vm2618, %v2611, %v2615
      %v2620 = vand.u32 2147483647, %v2610
      %vm2621 = vcmp.eq.f32.partialorder %v2620, 8.507059e+37
      %v2622 = vand.u32 %v2610, 2147483648
      %v2623 = vor.u32 1.1754944e-38, %v2622
      %v2624 = vsel %vm2621, %v2623, %v2619
      %v2625 = vmul.f32 %v2600, %v2624
      %v2626 = vmin.f32 %v2625, 1.0
      %v2627 = vmax.f32 %v2626, -1.0
      %v2628 = vadd.f32 %v2027, 1.0
      %v2629 = vadd.f32 %v2067, 1.0
      %v2630 = vadd.f32 %v2107, 1.0
      %v2631 = vadd.f32 %v2147, 1.0
      %v2632 = vadd.f32 %v2187, 1.0
      %v2633 = vadd.f32 %v2227, 1.0
      %v2634 = vadd.f32 %v2267, 1.0
      %v2635 = vadd.f32 %v2307, 1.0
      %v2636 = vadd.f32 %v2347, 1.0
      %v2637 = vadd.f32 %v2387, 1.0
      %v2638 = vadd.f32 %v2427, 1.0
      %v2639 = vadd.f32 %v2467, 1.0
      %v2640 = vadd.f32 %v2507, 1.0
      %v2641 = vadd.f32 %v2547, 1.0
      %v2642 = vadd.f32 %v2587, 1.0
      %v2643 = vadd.f32 %v2627, 1.0
      %v2644 = vmul.f32 %v1956, %v2628
      %v2645 = vmul.f32 %v1957, %v2629
      %v2646 = vmul.f32 %v1958, %v2630
      %v2647 = vmul.f32 %v1959, %v2631
      %v2648 = vmul.f32 %v1960, %v2632
      %v2649 = vmul.f32 %v1961, %v2633
      %v2650 = vmul.f32 %v1962, %v2634
      %v2651 = vmul.f32 %v1963, %v2635
      %v2652 = vmul.f32 %v1964, %v2636
      %v2653 = vmul.f32 %v1965, %v2637
      %v2654 = vmul.f32 %v1966, %v2638
      %v2655 = vmul.f32 %v1967, %v2639
      %v2656 = vmul.f32 %v1968, %v2640
      %v2657 = vmul.f32 %v1969, %v2641
      %v2658 = vmul.f32 %v1970, %v2642
      %v2659 = vmul.f32 %v1971, %v2643
      %v2660 = vld [vmem:[%s3] sm:$0xff]
      %v2661 = vld [vmem:[%s3 + $0x8] sm:$0xff]
      %vm2662 = vcmask 130048
      %v2664 = vsel %vm2662, %v2644, 0
      %v2667 = vsel %vm2662, %v2645, 0
      %v2670 = vsel %vm2662, %v2646, 0
      %v2673 = vsel %vm2662, %v2647, 0
      %v2676 = vsel %vm2662, %v2648, 0
      %v2679 = vsel %vm2662, %v2649, 0
      %v2682 = vsel %vm2662, %v2650, 0
      %v2685 = vsel %vm2662, %v2651, 0
      %v2688 = vsel %vm2662, %v2652, 0
      %v2691 = vsel %vm2662, %v2653, 0
      %v2694 = vsel %vm2662, %v2654, 0
      %v2697 = vsel %vm2662, %v2655, 0
      %v2700 = vsel %vm2662, %v2656, 0
      %v2703 = vsel %vm2662, %v2657, 0
      %v2706 = vsel %vm2662, %v2658, 0
      %v2709 = vsel %vm2662, %v2659, 0
      %2711 = vmatpush.msra.mxu0 0.0
      %2712 = vmatpush.msra.mxu0 0.0
      %2713 = vmatpush.msra.mxu0 0.0
      %2714 = vmatpush.msra.mxu0 0.0
      %2715 = vmatpush.msra.mxu0 0.0
      %2716 = vmatpush.msra.mxu0 0.0
      %2717 = vmatpush.msra.mxu0 0.0
      %2718 = vmatpush.msra.mxu0 0.0
      %2719 = vmatpush.msra.mxu0 0.0
      %2720 = vmatpush.msra.mxu0 0.0
      %2721 = vmatpush.msra.mxu0 0.0
      %2722 = vmatpush.msra.mxu0 0.0
      %2723 = vmatpush.msra.mxu0 0.0
      %2724 = vmatpush.msra.mxu0 0.0
      %2725 = vmatpush.msra.mxu0 %v2661
      %2726 = vmatpush.msra.mxu0 %v2660
      %2727 = vmatmul.f32.gmra.mxu0 %v2664
      %v2728 = vpop.f32.mrf.mxu0
      %v2729 = vadd.f32 0.0, %v2728
      %2730 = vmatmul.f32.gmra.mxu0 %v2667
      %v2731 = vpop.f32.mrf.mxu0
      %v2732 = vadd.f32 0.0, %v2731
      %2733 = vmatmul.f32.gmra.mxu0 %v2670
      %v2734 = vpop.f32.mrf.mxu0
      %v2735 = vadd.f32 0.0, %v2734
      %2736 = vmatmul.f32.gmra.mxu0 %v2673
      %v2737 = vpop.f32.mrf.mxu0
      %v2738 = vadd.f32 0.0, %v2737
      %2739 = vmatmul.f32.gmra.mxu0 %v2676
      %v2740 = vpop.f32.mrf.mxu0
      %v2741 = vadd.f32 0.0, %v2740
      %2742 = vmatmul.f32.gmra.mxu0 %v2679
      %v2743 = vpop.f32.mrf.mxu0
      %v2744 = vadd.f32 0.0, %v2743
      %2745 = vmatmul.f32.gmra.mxu0 %v2682
      %v2746 = vpop.f32.mrf.mxu0
      %v2747 = vadd.f32 0.0, %v2746
      %2748 = vmatmul.f32.gmra.mxu0 %v2685
      %v2749 = vpop.f32.mrf.mxu0
      %v2750 = vadd.f32 0.0, %v2749
      %2751 = vmatmul.f32.gmra.mxu0 %v2688
      %v2752 = vpop.f32.mrf.mxu0
      %v2753 = vadd.f32 0.0, %v2752
      %2754 = vmatmul.f32.gmra.mxu0 %v2691
      %v2755 = vpop.f32.mrf.mxu0
      %v2756 = vadd.f32 0.0, %v2755
      %2757 = vmatmul.f32.gmra.mxu0 %v2694
      %v2758 = vpop.f32.mrf.mxu0
      %v2759 = vadd.f32 0.0, %v2758
      %2760 = vmatmul.f32.gmra.mxu0 %v2697
      %v2761 = vpop.f32.mrf.mxu0
      %v2762 = vadd.f32 0.0, %v2761
      %2763 = vmatmul.f32.gmra.mxu0 %v2700
      %v2764 = vpop.f32.mrf.mxu0
      %v2765 = vadd.f32 0.0, %v2764
      %2766 = vmatmul.f32.gmra.mxu0 %v2703
      %v2767 = vpop.f32.mrf.mxu0
      %v2768 = vadd.f32 0.0, %v2767
      %2769 = vmatmul.f32.gmra.mxu0 %v2706
      %v2770 = vpop.f32.mrf.mxu0
      %v2771 = vadd.f32 0.0, %v2770
      %2772 = vmatmul.f32.gmra.mxu0 %v2709
      %v2773 = vpop.f32.mrf.mxu0
      %v2774 = vadd.f32 0.0, %v2773
      %2775 = vdwg.mxu0
      %2776 = vst.msk [vmem:[%s221] sm:$0xff] %vm247, %v2729
      %2777 = vst.msk [vmem:[%s221 + $0x8] sm:$0xff] %vm247, %v2732
      %2778 = vst.msk [vmem:[%s221 + $0x10] sm:$0xff] %vm247, %v2735
      %2779 = vst.msk [vmem:[%s221 + $0x18] sm:$0xff] %vm247, %v2738
      %2780 = vst.msk [vmem:[%s221 + $0x20] sm:$0xff] %vm247, %v2741
      %2781 = vst.msk [vmem:[%s221 + $0x28] sm:$0xff] %vm247, %v2744
      %2782 = vst.msk [vmem:[%s221 + $0x30] sm:$0xff] %vm247, %v2747
      %2783 = vst.msk [vmem:[%s221 + $0x38] sm:$0xff] %vm247, %v2750
      %2784 = vst.msk [vmem:[%s221 + $0x40] sm:$0xff] %vm247, %v2753
      %2785 = vst.msk [vmem:[%s221 + $0x48] sm:$0xff] %vm247, %v2756
      %2786 = vst.msk [vmem:[%s221 + $0x50] sm:$0xff] %vm247, %v2759
      %2787 = vst.msk [vmem:[%s221 + $0x58] sm:$0xff] %vm247, %v2762
      %2788 = vst.msk [vmem:[%s221 + $0x60] sm:$0xff] %vm247, %v2765
      %2789 = vst.msk [vmem:[%s221 + $0x68] sm:$0xff] %vm247, %v2768
      %2790 = vst.msk [vmem:[%s221 + $0x70] sm:$0xff] %vm247, %v2771
      %2791 = vst.msk [vmem:[%s221 + $0x78] sm:$0xff] %vm247, %v2774
      %s2792 = smul.u32 8, %s20
      %p2793 = scmp.lt.s32.totalorder %s19, 1
      %s2794 = scalar_select %p2793, %s19, 1
      %p2795 = scmp.lt.s32.totalorder %s2792, 15
      %s2796 = scalar_select %p2795, %s2792, 15
      %s2797 = smul.addr %s2796, 2
      %s2798 = smul.addr %s2794, 32
      %s2799 = sadd.s32 %s2797, %s2798
      %s2800 = smul.addr %s2799, 8
      %s2801 = scalar_lea.vmem %s4, %s2800
      // Predicated region
      $region37: #{tpu_custom_call.1} parent=35 // pred_check
        %p2802 = pneg %p136
      $region38: #{tpu_custom_call.1} parent=35 // pred_check_branch
        %2804 = sbr.rel (%p2802) target = $region40
      $region39: #{tpu_custom_call.1} parent=35 // pred_region
        %s2805 = smul.u32 8, %s20
      $region40: #{tpu_custom_call.1} parent=35 // pred_fallthru
        _
    $region36: #{tpu_custom_call.1} parent=5 // pred_fallthru
      _
    %p2806 = scmp.le.s32.totalorder 2, %s10
    // Predicated region
    $region41: #{tpu_custom_call.1} parent=5 // pred_check
      %p2807 = pneg %p2806
    $region42: #{tpu_custom_call.1} parent=5 // pred_check_branch
      %2809 = sbr.rel (%p2807) target = $region44
    $region43: #{tpu_custom_call.1} parent=5 // pred_region
      %s2810 = ssub.s32 %s10, 2
      // Predicated region
      $region45: #{tpu_custom_call.1} parent=43 // pred_check
        %p2811 = pneg %p142
      $region46: #{tpu_custom_call.1} parent=43 // pred_check_branch
        %2813 = sbr.rel (%p2811) target = $region48
      $region47: #{tpu_custom_call.1} parent=43 // pred_region
        %s2814 = smul.u32 8, %s22
        %p2815 = scmp.lt.s32.totalorder %s21, 1
        %s2816 = scalar_select %p2815, %s21, 1
        %p2817 = scmp.lt.s32.totalorder %s2814, 15
        %s2818 = scalar_select %p2817, %s2814, 15
        %s2819 = smul.addr %s2818, 2
        %s2820 = smul.addr %s2816, 32
        %s2821 = sadd.s32 %s2819, %s2820
        %s2822 = smul.addr %s2821, 8
        %s2823 = scalar_lea.vmem %s4, %s2822
      $region48: #{tpu_custom_call.1} parent=43 // pred_fallthru
        _
    $region44: #{tpu_custom_call.1} parent=5 // pred_fallthru
      _
  $region6: #{tpu_custom_call.1} parent=0 // loop_footer
    %s14 = sadd.s32 1, %s10
  $region7: #{tpu_custom_call.1} parent=0 // loop_footer_branch
    %9 = sbr.rel target = $region3
  $region8: #{tpu_custom_call.1} parent=0 // loop_exit
    _

</llo_original>
